<compile_context>
chip_gen: v7x
topology: tpu7x:2x2x1
jax: 0.10.0
libtpu: 0.0.40
codegen_flags: <defaults>
</compile_context>

<pallas_src>
import functools

import jax
import jax.numpy as jnp
from jax import lax
from jax.experimental import pallas as pl
from jax.experimental.pallas import tpu as pltpu


def _clip_vision_kernel(patches_ref, wp_ref, wproj_ref, bproj_ref, out_ref, *,
                        n_patches, block_b, output_normalize):
    """One grid step == one tile of block_b batch elements.

    patches_ref : [N*block_b, D_in]  bf16  raw patches, PATCH-MAJOR rows
                                           (input Normalize folded into wp)
    wp_ref      : [D_in, D_model]    bf16  patch-embed weight (conv-as-matmul)
    wproj_ref   : [D_model, D_emb]   bf16  projection weight, pre-scaled by 1/N
    bproj_ref   : [1, D_emb]         f32   folded bias (bp @ wproj + bproj)
    out_ref     : [block_b, D_emb]   f32   embeddings for this batch tile
    """
    x = patches_ref[...]                                    # bf16, no in-kernel cast

    # Patch embedding: one large 2-D MXU matmul (bf16 operands, f32 accumulate).
    h = jnp.dot(x, wp_ref[...], preferred_element_type=jnp.float32)

    # Mean pool over patches.  Rows are patch-major, so this is a sum over the
    # leading (untiled) axis -> N sequential vreg adds; the 1/N scale lives in
    # wproj, the pre-pool bias lives in bproj.
    pooled = jnp.sum(h.reshape(n_patches, block_b, h.shape[-1]), axis=0)

    # Projection to embedding space (bf16 operands, f32 accumulation).
    emb = jnp.dot(pooled.astype(jnp.bfloat16), wproj_ref[...],
                  preferred_element_type=jnp.float32)
    emb = emb + bproj_ref[...]

    if output_normalize:
        # F.normalize(emb, dim=-1): emb / max(||emb||, 1e-12).  rsqrt runs on
        # the EUP slot; the eps clamp is applied to the squared norm (eps**2).
        sq = jnp.sum(emb * emb, axis=-1, keepdims=True)
        emb = emb * lax.rsqrt(jnp.maximum(sq, 1e-24))

    out_ref[...] = emb


def _vmem_limit_bytes():
    """Per-TensorCore VMEM limit with headroom (None -> compiler default)."""
    try:
        cap = pltpu.get_tpu_info().vmem_capacity_bytes
    except Exception:
        return None
    # v7x: 64 MiB/TC -> ~48 MiB usable; v5e/v6e: 128 MiB -> cap at ~100 MiB.
    return int(min(cap - 16 * 1024 * 1024, 100 * 1024 * 1024))


def _compiler_params():
    kwargs = dict(dimension_semantics=("parallel",))
    limit = _vmem_limit_bytes()
    if limit is not None and limit > 0:
        kwargs["vmem_limit_bytes"] = limit
    return pltpu.CompilerParams(**kwargs)


def _const_spec(shape, single_buffered):
    """BlockSpec for a grid-invariant operand (weights / bias)."""
    index_map = lambda b: (0,) * len(shape)
    if single_buffered and hasattr(pl, "Buffered"):
        try:
            return pl.BlockSpec(shape, index_map, pipeline_mode=pl.Buffered(1))
        except TypeError:
            pass
    return pl.BlockSpec(shape, index_map)


def _choose_block_b(B, N, D_in, D_model, vmem_budget_bytes=32 * 1024 * 1024):
    """Pick a batch tile: MXU-saturating M, >= 4 grid steps, multiple of 8."""
    target = max(128, -(-256 // N))                 # bB >= 128 and bB*N >= 256
    by_grid = max(8, (B // 4) // 8 * 8) if B >= 32 else 8
    bb = max(8, (min(target, by_grid) // 8) * 8)

    def tile_bytes(b):
        # bf16 input tile x2 pipeline buffers + f32 patch-embed intermediate.
        return 2 * (b * N * D_in * 2) + b * N * D_model * 4

    while bb > 8 and tile_bytes(bb) > vmem_budget_bytes:
        bb -= 8
    return bb


def clip_vision_forward(vision, params, *, patch_size, output_normalize=False,
                        block_B=None):
    """vision: [B, C, H, W] float32 (NCHW, like the PyTorch module)."""
    B, C, H, W = vision.shape
    p = patch_size
    assert H % p == 0 and W % p == 0
    nh, nw = H // p, W // p
    N = nh * nw
    D_in = C * p * p
    D_model = params["w_patch"].shape[1]
    D_embed = params["w_proj"].shape[1]

    if block_B is None:
        block_B = _choose_block_b(B, N, D_in, D_model)
    # (8,128) rule: the input block's second-to-last dim (block_B*N) must be a
    # multiple of 8 (last dims are full array extents).
    assert block_B % 8 == 0, "block_B must be a multiple of 8 (sublane rule)"

    grid_b = pl.cdiv(B, block_B)
    B_pad = grid_b * block_B
    if B_pad != B:
        vision = jnp.pad(vision, ((0, B_pad - B), (0, 0), (0, 0), (0, 0)))

    # --- fold the per-channel Normalize into the patch-embed weights --------
    #   ((x - mean)/std) @ W + b == x @ (W * (1/std)[:,None]) + (b - (mean/std)@W)
    mean_feat = jnp.broadcast_to(
        params["mean"].reshape(C, 1, 1), (C, p, p)).reshape(D_in)
    std_feat = jnp.broadcast_to(
        params["std"].reshape(C, 1, 1), (C, p, p)).reshape(D_in)
    w_patch = params["w_patch"].astype(jnp.float32)
    wp_f32 = w_patch * (1.0 / std_feat)[:, None]
    bp_f32 = (params["b_patch"].reshape(1, D_model).astype(jnp.float32)
              - (mean_feat / std_feat) @ w_patch)

    # --- fold the 1/N mean scale and pre-pool bias into the projection ------
    #   mean_n(x@wp + bp) @ Wp + b  ==  sum_n(x@wp) @ (Wp/N) + (bp @ Wp + b)
    w_proj = params["w_proj"].astype(jnp.float32)
    wproj_f32 = w_proj * (1.0 / N)
    bproj = (bp_f32 @ w_proj
             + params["b_proj"].reshape(1, D_embed).astype(jnp.float32))

    # bf16 weight storage: native MXU operand precision, half the VMEM bytes.
    wp = wp_f32.astype(jnp.bfloat16)
    wproj = wproj_f32.astype(jnp.bfloat16)

    # --- patch extraction: one fused transpose + bf16 cast ------------------
    # Per batch tile the rows are PATCH-MAJOR ([nh, nw, block_B]) so the
    # in-kernel pool is a leading-axis sum; casting to bf16 in the same op
    # halves the materialized HBM copy.
    # TODO(synk): for large images, do this re-tile in-kernel via manual DMA to
    # avoid materializing a transposed copy of the NCHW image in HBM at all.
    x = vision.astype(jnp.float32).reshape(grid_b, block_B, C, nh, p, nw, p)
    x = x.transpose(0, 3, 5, 1, 2, 4, 6)            # (g, nh, nw, bB, C, p, p)
    patches2d = x.reshape(grid_b * N * block_B, D_in).astype(jnp.bfloat16)

    kernel = functools.partial(_clip_vision_kernel, n_patches=N,
                               block_b=block_B,
                               output_normalize=output_normalize)

    def _call(single_buffer_weights):
        return pl.pallas_call(
            kernel,
            out_shape=jax.ShapeDtypeStruct((B_pad, D_embed), jnp.float32),
            grid_spec=pltpu.PrefetchScalarGridSpec(
                num_scalar_prefetch=0,
                grid=(grid_b,),
                in_specs=[
                    pl.BlockSpec((block_B * N, D_in), lambda b: (b, 0)),
                    _const_spec((D_in, D_model), single_buffer_weights),
                    _const_spec((D_model, D_embed), single_buffer_weights),
                    _const_spec((1, D_embed), single_buffer_weights),
                ],
                out_specs=pl.BlockSpec((block_B, D_embed), lambda b: (b, 0)),
            ),
            compiler_params=_compiler_params(),
        )(patches2d, wp, wproj, bproj)

    try:
        out = _call(True)           # single-buffered constant operands
    except Exception:
        # TODO(synk): pipeline_mode=pl.Buffered(1) unsupported on this jax
        # version; fall back to default double-buffered weights.
        out = _call(False)

    return out[:B]


def _reference_forward(vision, params, *, patch_size, output_normalize):
    """Plain-JAX f32 reference mirroring the PyTorch module semantics."""
    B, C, H, W = vision.shape
    p = patch_size
    nh, nw = H // p, W // p
    x = ((vision - params["mean"].reshape(1, C, 1, 1))
         / params["std"].reshape(1, C, 1, 1))
    patches = x.reshape(B, C, nh, p, nw, p).transpose(0, 2, 4, 1, 3, 5)
    patches = patches.reshape(B, nh * nw, C * p * p)
    h = patches @ params["w_patch"] + params["b_patch"]
    pooled = h.mean(axis=1)
    emb = pooled @ params["w_proj"] + params["b_proj"].reshape(-1)
    if output_normalize:
        n = jnp.sqrt(jnp.sum(emb * emb, axis=-1, keepdims=True))
        emb = emb / jnp.maximum(n, 1e-12)
    return emb


if __name__ == "__main__":
    # NCHW image batch consistent with the module's forward.  B=512 gives the
    # auto-chosen block_B=128 -> patch-embed M = 512, projection M = 128, and a
    # 4-step grid (>= 2 steps per TensorCore on v7x).  Total input is only 2 MB.
    B, C, H, W = 512, 4, 16, 16
    PATCH = 8
    D_MODEL, D_EMBED = 128, 128
    D_IN = C * PATCH * PATCH

    key = jax.random.PRNGKey(0)
    k_img, k_wp, k_bp, k_wproj, k_bproj, k_mean = jax.random.split(key, 6)

    vision = jax.random.uniform(k_img, (B, C, H, W), jnp.float32)  # image in [0,1]

    params = {
        # deterministic synthetic "normalize" stats (per channel)
        "mean": jax.random.uniform(k_mean, (C,), jnp.float32, 0.3, 0.6),
        "std": jnp.full((C,), 0.25, jnp.float32),
        # patch-embedding conv expressed as matmul weights
        "w_patch": jax.random.normal(k_wp, (D_IN, D_MODEL), jnp.float32)
        * (1.0 / jnp.sqrt(D_IN)),
        "b_patch": jax.random.normal(k_bp, (1, D_MODEL), jnp.float32) * 0.01,
        "w_proj": jax.random.normal(k_wproj, (D_MODEL, D_EMBED), jnp.float32)
        * (1.0 / jnp.sqrt(D_MODEL)),
        "b_proj": jax.random.normal(k_bproj, (1, D_EMBED), jnp.float32) * 0.01,
    }

    for norm_out in (True, False):
        emb = clip_vision_forward(vision, params, patch_size=PATCH,
                                  output_normalize=norm_out)
        emb = jax.block_until_ready(emb)
        ref = _reference_forward(vision, params, patch_size=PATCH,
                                 output_normalize=norm_out)
        assert emb.shape == (B, D_EMBED)
        # bf16-stored patches/weights (f32 accumulation) vs the all-f32 reference.
        assert jnp.allclose(emb, ref, atol=3e-2, rtol=2e-2), (
            f"mismatch vs reference (output_normalize={norm_out})")

    print("KERNEL_OK")
</pallas_src>

<mosaic_0001>
module attributes {stable_mosaic.version = 11 : i64} {
  func.func @_clip_vision_kernel(%arg0: i32, %arg1: memref<512x256xbf16, #tpu.memory_space<vmem>>, %arg2: memref<256x128xbf16, #tpu.memory_space<vmem>>, %arg3: memref<128x128xbf16, #tpu.memory_space<vmem>>, %arg4: memref<1x128xf32, #tpu.memory_space<vmem>>, %arg5: memref<128x128xf32, #tpu.memory_space<vmem>>) attributes {dimension_semantics = [#tpu.dimension_semantics<parallel>], iteration_bounds = array<i64: 4>, scalar_prefetch = 0 : i64, scratch_operands = 0 : i64, tpu.core_type = #tpu.core_type<tc>, window_params = [{transform_indices = @transform_0, window_bounds = array<i64: 512, 256>}, {pipeline_mode = #tpu.pipeline_mode<synchronous>, transform_indices = @transform_1, window_bounds = array<i64: 256, 128>}, {pipeline_mode = #tpu.pipeline_mode<synchronous>, transform_indices = @transform_2, window_bounds = array<i64: 128, 128>}, {pipeline_mode = #tpu.pipeline_mode<synchronous>, transform_indices = @transform_3, window_bounds = array<i64: 1, 128>}, {transform_indices = @transform_4, window_bounds = array<i64: 128, 128>}]} {
    %c0 = arith.constant 0 : index
    %c0_0 = arith.constant 0 : index
    %0 = vector.load %arg1[%c0, %c0_0] : memref<512x256xbf16, #tpu.memory_space<vmem>>, vector<512x256xbf16>
    %c0_1 = arith.constant 0 : index
    %c0_2 = arith.constant 0 : index
    %1 = vector.load %arg2[%c0_1, %c0_2] : memref<256x128xbf16, #tpu.memory_space<vmem>>, vector<256x128xbf16>
    %cst = arith.constant dense<0.000000e+00> : vector<512x128xf32>
    %2 = tpu.matmul %0, %1, %cst {dimension_numbers = #tpu.dot_dimension_numbers<[1], [0], [0], [1], [0, 0, 1, 1], [], []>} : vector<512x256xbf16>, vector<256x128xbf16>, vector<512x128xf32> -> vector<512x128xf32>
    %3 = vector.shape_cast %2 : vector<512x128xf32> to vector<4x128x128xf32>
    %cst_3 = arith.constant dense<0.000000e+00> : vector<128x128xf32>
    %4 = vector.multi_reduction <add>, %3, %cst_3 [0] : vector<4x128x128xf32> to vector<128x128xf32>
    %5 = arith.truncf %4 : vector<128x128xf32> to vector<128x128xbf16>
    %c0_4 = arith.constant 0 : index
    %c0_5 = arith.constant 0 : index
    %6 = vector.load %arg3[%c0_4, %c0_5] : memref<128x128xbf16, #tpu.memory_space<vmem>>, vector<128x128xbf16>
    %cst_6 = arith.constant dense<0.000000e+00> : vector<128x128xf32>
    %7 = tpu.matmul %5, %6, %cst_6 {dimension_numbers = #tpu.dot_dimension_numbers<[1], [0], [0], [1], [0, 0, 1, 1], [], []>} : vector<128x128xbf16>, vector<128x128xbf16>, vector<128x128xf32> -> vector<128x128xf32>
    %c0_7 = arith.constant 0 : index
    %c0_8 = arith.constant 0 : index
    %8 = vector.load %arg4[%c0_7, %c0_8] : memref<1x128xf32, #tpu.memory_space<vmem>>, vector<1x128xf32>
    %9 = vector.broadcast %8 : vector<1x128xf32> to vector<128x128xf32>
    %10 = arith.addf %7, %9 : vector<128x128xf32>
    %11 = arith.mulf %10, %10 : vector<128x128xf32>
    %cst_9 = arith.constant dense<0.000000e+00> : vector<128xf32>
    %12 = vector.multi_reduction <add>, %11, %cst_9 [1] : vector<128x128xf32> to vector<128xf32>
    %13 = vector.shape_cast %12 : vector<128xf32> to vector<128x1xf32>
    %cst_10 = arith.constant 1.000000e-24 : f32
    %14 = vector.broadcast %cst_10 : f32 to vector<128x1xf32>
    %15 = arith.maximumf %13, %14 : vector<128x1xf32>
    %16 = math.rsqrt %15 : vector<128x1xf32>
    %17 = vector.broadcast %16 : vector<128x1xf32> to vector<128x128xf32>
    %18 = arith.mulf %10, %17 : vector<128x128xf32>
    %c0_11 = arith.constant 0 : index
    %c0_12 = arith.constant 0 : index
    %19 = vector.load %arg5[%c0_11, %c0_12] : memref<128x128xf32, #tpu.memory_space<vmem>>, vector<128x128xf32>
    tpu.vector_store %arg5[%c0_11, %c0_12], %18 {strides = array<i32>} : memref<128x128xf32, #tpu.memory_space<vmem>>, vector<128x128xf32>,
    return
  }
  func.func @transform_0(%arg0: i32) -> (i32, i32) {
    %c0_i32 = arith.constant 0 : i32
    %c0_i32_0 = arith.constant 0 : i32
    return %arg0, %c0_i32 : i32, i32
  }
  func.func @transform_1(%arg0: i32) -> (i32, i32) {
    %c0_i32 = arith.constant 0 : i32
    %c0_i32_0 = arith.constant 0 : i32
    %c0_i32_1 = arith.constant 0 : i32
    return %c0_i32, %c0_i32_0 : i32, i32
  }
  func.func @transform_2(%arg0: i32) -> (i32, i32) {
    %c0_i32 = arith.constant 0 : i32
    %c0_i32_0 = arith.constant 0 : i32
    %c0_i32_1 = arith.constant 0 : i32
    return %c0_i32, %c0_i32_0 : i32, i32
  }
  func.func @transform_3(%arg0: i32) -> (i32, i32) {
    %c0_i32 = arith.constant 0 : i32
    %c0_i32_0 = arith.constant 0 : i32
    %c0_i32_1 = arith.constant 0 : i32
    return %c0_i32, %c0_i32_0 : i32, i32
  }
  func.func @transform_4(%arg0: i32) -> (i32, i32) {
    %c0_i32 = arith.constant 0 : i32
    %c0_i32_0 = arith.constant 0 : i32
    return %arg0, %c0_i32 : i32, i32
  }
}

module attributes {stable_mosaic.version = 11 : i64} {
  func.func @_clip_vision_kernel(%arg0: i32, %arg1: memref<512x256xbf16, #tpu.memory_space<vmem>>, %arg2: memref<256x128xbf16, #tpu.memory_space<vmem>>, %arg3: memref<128x128xbf16, #tpu.memory_space<vmem>>, %arg4: memref<1x128xf32, #tpu.memory_space<vmem>>, %arg5: memref<128x128xf32, #tpu.memory_space<vmem>>) attributes {dimension_semantics = [#tpu.dimension_semantics<parallel>], iteration_bounds = array<i64: 4>, scalar_prefetch = 0 : i64, scratch_operands = 0 : i64, tpu.core_type = #tpu.core_type<tc>, window_params = [{transform_indices = @transform_0, window_bounds = array<i64: 512, 256>}, {pipeline_mode = #tpu.pipeline_mode<synchronous>, transform_indices = @transform_1, window_bounds = array<i64: 256, 128>}, {pipeline_mode = #tpu.pipeline_mode<synchronous>, transform_indices = @transform_2, window_bounds = array<i64: 128, 128>}, {pipeline_mode = #tpu.pipeline_mode<synchronous>, transform_indices = @transform_3, window_bounds = array<i64: 1, 128>}, {transform_indices = @transform_4, window_bounds = array<i64: 128, 128>}]} {
    %c0 = arith.constant 0 : index
    %c0_0 = arith.constant 0 : index
    %0 = vector.load %arg1[%c0, %c0_0] : memref<512x256xbf16, #tpu.memory_space<vmem>>, vector<512x256xbf16>
    %c0_1 = arith.constant 0 : index
    %c0_2 = arith.constant 0 : index
    %1 = vector.load %arg2[%c0_1, %c0_2] : memref<256x128xbf16, #tpu.memory_space<vmem>>, vector<256x128xbf16>
    %cst = arith.constant dense<0.000000e+00> : vector<512x128xf32>
    %2 = tpu.matmul %0, %1, %cst {dimension_numbers = #tpu.dot_dimension_numbers<[1], [0], [0], [1], [0, 0, 1, 1], [], []>} : vector<512x256xbf16>, vector<256x128xbf16>, vector<512x128xf32> -> vector<512x128xf32>
    %3 = vector.shape_cast %2 : vector<512x128xf32> to vector<4x128x128xf32>
    %cst_3 = arith.constant dense<0.000000e+00> : vector<128x128xf32>
    %4 = vector.multi_reduction <add>, %3, %cst_3 [0] : vector<4x128x128xf32> to vector<128x128xf32>
    %5 = arith.truncf %4 : vector<128x128xf32> to vector<128x128xbf16>
    %c0_4 = arith.constant 0 : index
    %c0_5 = arith.constant 0 : index
    %6 = vector.load %arg3[%c0_4, %c0_5] : memref<128x128xbf16, #tpu.memory_space<vmem>>, vector<128x128xbf16>
    %cst_6 = arith.constant dense<0.000000e+00> : vector<128x128xf32>
    %7 = tpu.matmul %5, %6, %cst_6 {dimension_numbers = #tpu.dot_dimension_numbers<[1], [0], [0], [1], [0, 0, 1, 1], [], []>} : vector<128x128xbf16>, vector<128x128xbf16>, vector<128x128xf32> -> vector<128x128xf32>
    %c0_7 = arith.constant 0 : index
    %c0_8 = arith.constant 0 : index
    %8 = vector.load %arg4[%c0_7, %c0_8] : memref<1x128xf32, #tpu.memory_space<vmem>>, vector<1x128xf32>
    %9 = vector.broadcast %8 : vector<1x128xf32> to vector<128x128xf32>
    %10 = arith.addf %7, %9 : vector<128x128xf32>
    %11 = arith.mulf %10, %10 : vector<128x128xf32>
    %cst_9 = arith.constant dense<0.000000e+00> : vector<128xf32>
    %12 = vector.multi_reduction <add>, %11, %cst_9 [1] : vector<128x128xf32> to vector<128xf32>
    %13 = vector.shape_cast %12 : vector<128xf32> to vector<128x1xf32>
    %cst_10 = arith.constant 1.000000e-24 : f32
    %14 = vector.broadcast %cst_10 : f32 to vector<128x1xf32>
    %15 = arith.maximumf %13, %14 : vector<128x1xf32>
    %16 = math.rsqrt %15 : vector<128x1xf32>
    %17 = vector.broadcast %16 : vector<128x1xf32> to vector<128x128xf32>
    %18 = arith.mulf %10, %17 : vector<128x128xf32>
    %c0_11 = arith.constant 0 : index
    %c0_12 = arith.constant 0 : index
    %19 = vector.load %arg5[%c0_11, %c0_12] : memref<128x128xf32, #tpu.memory_space<vmem>>, vector<128x128xf32>
    tpu.vector_store %arg5[%c0_11, %c0_12], %18 {strides = array<i32>} : memref<128x128xf32, #tpu.memory_space<vmem>>, vector<128x128xf32>,
    return
  }
  func.func @transform_0(%arg0: i32) -> (i32, i32) {
    %c0_i32 = arith.constant 0 : i32
    %c0_i32_0 = arith.constant 0 : i32
    return %arg0, %c0_i32 : i32, i32
  }
  func.func @transform_1(%arg0: i32) -> (i32, i32) {
    %c0_i32 = arith.constant 0 : i32
    %c0_i32_0 = arith.constant 0 : i32
    %c0_i32_1 = arith.constant 0 : i32
    return %c0_i32, %c0_i32_0 : i32, i32
  }
  func.func @transform_2(%arg0: i32) -> (i32, i32) {
    %c0_i32 = arith.constant 0 : i32
    %c0_i32_0 = arith.constant 0 : i32
    %c0_i32_1 = arith.constant 0 : i32
    return %c0_i32, %c0_i32_0 : i32, i32
  }
  func.func @transform_3(%arg0: i32) -> (i32, i32) {
    %c0_i32 = arith.constant 0 : i32
    %c0_i32_0 = arith.constant 0 : i32
    %c0_i32_1 = arith.constant 0 : i32
    return %c0_i32, %c0_i32_0 : i32, i32
  }
  func.func @transform_4(%arg0: i32) -> (i32, i32) {
    %c0_i32 = arith.constant 0 : i32
    %c0_i32_0 = arith.constant 0 : i32
    return %arg0, %c0_i32 : i32, i32
  }
}

</mosaic_0001>

<llo_original>
// kernel: tpu_custom_call.1
$region0: #{tpu_custom_call.1}
  #allocation0 [shape = 'u32[]', space=smem, size = 0x4, offset = 0x4, fixed_abs, tag = 'smem constant byte address 0x4 - core index']
  #allocation1 [shape = 'u32[144,128]{1,0:T(1,128)}', space=vmem, size = 0x12000, scoped, tag = 'internal scratch']
  %s0 = inlined_call_operand.hbm [shape: bf16[2048,256], index: 0, kind: input, shape index: {}]
  %s1 = inlined_call_operand.hbm [shape: bf16[256,128], index: 1, kind: input, shape index: {}]
  %s2 = inlined_call_operand.hbm [shape: bf16[128,128], index: 2, kind: input, shape index: {}]
  %s3 = inlined_call_operand.vmem [shape: f32[1,128], index: 3, kind: input, shape index: {}]
  %s4 = inlined_call_operand.hbm [shape: f32[512,128], index: 4, kind: output, shape index: {}]
  %s5 = sld [smem:[#allocation0]]
  $region61: #{tpu_custom_call.1} parent=0
    _
  %s7 = ssub.s32 1, %s5
  %s8 = scalar_select 0, %s7, %s5
  $region1: #{tpu_custom_call.1} parent=0
    #allocation2 [shape = 'u8[524288]{0}', space=vmem, size = 0x80000, scoped, tag = 'input window, operand 0']
    #allocation3 [shape = 's32[2]{0}', space=sflag, size = 0x8, scoped, tag = 'scoped memory for tpu_custom_call.1']
    #allocation4 [shape = 's32[2]{0}', space=sflag, size = 0x8, scoped, tag = 'scoped memory for tpu_custom_call.1']
    #allocation5 [shape = 'u8[65536]{0}', space=vmem, size = 0x10000, scoped, tag = 'input window, operand 1, single buffered']
    #allocation6 [shape = 's32[1]{0}', space=sflag, size = 0x4, scoped, tag = 'scoped memory for tpu_custom_call.1']
    #allocation7 [shape = 'u8[32768]{0}', space=vmem, size = 0x8000, scoped, tag = 'input window, operand 2, single buffered']
    #allocation8 [shape = 'u8[131072]{0}', space=vmem, size = 0x20000, scoped, tag = 'output window, operand 0']
    %9 = vsyncpa [#allocation3], 0
    %s10 = scalar_lea.sflag [#allocation3], 1
    %11 = vsyncpa %s10, 0
    %12 = vsyncpa [#allocation6], 0
    %13 = vsyncpa [#allocation4], 0
    %s14 = scalar_lea.sflag [#allocation4], 1
    %15 = vsyncpa %s14, 0
    loop: start=0, step=1, limit=6
    $region2: #{tpu_custom_call.1} parent=1 // loop_pre_header
      _
    $region3: #{tpu_custom_call.1} parent=1 // loop_header
      %s17 = sphi 0, %s21
      %p18 = scmp.ge.s32.totalorder %s17, 6
      %s27 = sphi 0, %s29
      %s30 = sphi 0, %s27
      %s31 = sphi 0, %s30
      %s47 = sphi 0, %s31
      %s51 = sphi 0, %s51
      %s53 = sphi 0, %s51
      %s54 = sphi 0, %s53
      %s68 = sphi 0, %s54
      %s72 = sphi 0, %s72
      %s74 = sphi 0, %s72
      %s75 = sphi 0, %s74
      %s89 = sphi 0, %s75
      %s93 = sphi 0, %s93
      %s95 = sphi 0, %s93
      %s96 = sphi 0, %s95
      %s110 = sphi 0, %s96
      %s116 = sphi 0, %s118
      %s119 = sphi 0, %s116
      %s120 = sphi 0, %s119
      %s136 = sphi 0, %s120
    $region4: #{tpu_custom_call.1} parent=1 // loop_header_branch
      %20 = sbr.rel (%p18) target = $region8
    $region5: #{tpu_custom_call.1} parent=1 // loop_body
      %s22 = ssub.s32 %s17, 1
      %s23 = ssub.s32 %s17, 2
      %s24 = sadd.s32 %s17, 1
      %s25 = ssub.s32 %s17, %s24
      %p26 = scmp.eq.s32.totalorder %s25, 0
      %s28 = sadd.s32 %s27, 1
      %s29 = scalar_select %p26, %s27, %s28
      %p32 = pneg %p26
      %p33 = scmp.eq.s32.totalorder %s17, 3
      %p34 = por %p32, %p33
      %p35 = scmp.ne.s32.totalorder %s27, %s30
      %p36 = scmp.eq.s32.totalorder %s17, 0
      %p37 = por %p35, %p36
      %p38 = scmp.ne.s32.totalorder %s27, %s30
      %p39 = scmp.eq.s32.totalorder %s22, 3
      %p40 = por %p38, %p39
      %p41 = scmp.ne.s32.totalorder %s30, %s31
      %p42 = scmp.eq.s32.totalorder %s22, 0
      %p43 = por %p41, %p42
      %p44 = scmp.ne.s32.totalorder %s30, %s31
      %p45 = scmp.eq.s32.totalorder %s23, 3
      %p46 = por %p44, %p45
      %p48 = scmp.ne.s32.totalorder %s31, %s47
      %p49 = scmp.eq.s32.totalorder %s23, 0
      %p50 = por %p48, %p49
      %s52 = sadd.s32 %s51, 1
      %p55 = scmp.eq.s32.totalorder %s17, 3
      %p56 = scmp.ne.s32.totalorder %s51, %s53
      %p57 = scmp.eq.s32.totalorder %s17, 0
      %p58 = por %p56, %p57
      %p59 = scmp.ne.s32.totalorder %s51, %s53
      %p60 = scmp.eq.s32.totalorder %s22, 3
      %p61 = por %p59, %p60
      %p62 = scmp.ne.s32.totalorder %s53, %s54
      %p63 = scmp.eq.s32.totalorder %s22, 0
      %p64 = por %p62, %p63
      %p65 = scmp.ne.s32.totalorder %s53, %s54
      %p66 = scmp.eq.s32.totalorder %s23, 3
      %p67 = por %p65, %p66
      %p69 = scmp.ne.s32.totalorder %s54, %s68
      %p70 = scmp.eq.s32.totalorder %s23, 0
      %p71 = por %p69, %p70
      %s73 = sadd.s32 %s72, 1
      %p76 = scmp.eq.s32.totalorder %s17, 3
      %p77 = scmp.ne.s32.totalorder %s72, %s74
      %p78 = scmp.eq.s32.totalorder %s17, 0
      %p79 = por %p77, %p78
      %p80 = scmp.ne.s32.totalorder %s72, %s74
      %p81 = scmp.eq.s32.totalorder %s22, 3
      %p82 = por %p80, %p81
      %p83 = scmp.ne.s32.totalorder %s74, %s75
      %p84 = scmp.eq.s32.totalorder %s22, 0
      %p85 = por %p83, %p84
      %p86 = scmp.ne.s32.totalorder %s74, %s75
      %p87 = scmp.eq.s32.totalorder %s23, 3
      %p88 = por %p86, %p87
      %p90 = scmp.ne.s32.totalorder %s75, %s89
      %p91 = scmp.eq.s32.totalorder %s23, 0
      %p92 = por %p90, %p91
      %s94 = sadd.s32 %s93, 1
      %p97 = scmp.eq.s32.totalorder %s17, 3
      %p98 = scmp.ne.s32.totalorder %s93, %s95
      %p99 = scmp.eq.s32.totalorder %s17, 0
      %p100 = por %p98, %p99
      %p101 = scmp.ne.s32.totalorder %s93, %s95
      %p102 = scmp.eq.s32.totalorder %s22, 3
      %p103 = por %p101, %p102
      %p104 = scmp.ne.s32.totalorder %s95, %s96
      %p105 = scmp.eq.s32.totalorder %s22, 0
      %p106 = por %p104, %p105
      %p107 = scmp.ne.s32.totalorder %s95, %s96
      %p108 = scmp.eq.s32.totalorder %s23, 3
      %p109 = por %p107, %p108
      %p111 = scmp.ne.s32.totalorder %s96, %s110
      %p112 = scmp.eq.s32.totalorder %s23, 0
      %p113 = por %p111, %p112
      %s114 = ssub.s32 %s17, %s24
      %p115 = scmp.eq.s32.totalorder %s114, 0
      %s117 = sadd.s32 %s116, 1
      %s118 = scalar_select %p115, %s116, %s117
      %p121 = pneg %p115
      %p122 = scmp.eq.s32.totalorder %s17, 3
      %p123 = por %p121, %p122
      %p124 = scmp.ne.s32.totalorder %s116, %s119
      %p125 = scmp.eq.s32.totalorder %s17, 0
      %p126 = por %p124, %p125
      %p127 = scmp.ne.s32.totalorder %s116, %s119
      %p128 = scmp.eq.s32.totalorder %s22, 3
      %p129 = por %p127, %p128
      %p130 = scmp.ne.s32.totalorder %s119, %s120
      %p131 = scmp.eq.s32.totalorder %s22, 0
      %p132 = por %p130, %p131
      %p133 = scmp.ne.s32.totalorder %s119, %s120
      %p134 = scmp.eq.s32.totalorder %s23, 3
      %p135 = por %p133, %p134
      %p137 = scmp.ne.s32.totalorder %s120, %s136
      %p138 = scmp.eq.s32.totalorder %s23, 0
      %p139 = por %p137, %p138
      %p140 = scmp.le.s32.totalorder 1, %s17
      %p141 = scmp.lt.s32.totalorder %s17, 5
      %p142 = pnand %p140, %p141
      %p143 = pneg %p142
      // Predicated region
      $region9: #{tpu_custom_call.1} parent=5 // pred_check
        _
      $region10: #{tpu_custom_call.1} parent=5 // pred_check_branch
        %145 = sbr.rel (%p142) target = $region12
      $region11: #{tpu_custom_call.1} parent=5 // pred_region
        %s146 = ssub.s32 %s17, 1
        // Predicated region
        $region13: #{tpu_custom_call.1} parent=11 // pred_check
          %p147 = pneg %p64
        $region14: #{tpu_custom_call.1} parent=11 // pred_check_branch
          %149 = sbr.rel (%p147) target = $region16
        $region15: #{tpu_custom_call.1} parent=11 // pred_region
          %s151 = ssub.s32 2048, 2048
          %152 = vsyncadd [#allocation6], %s151
          %s153 = sshll.u32 [#allocation5], 4
          %s154 = int_to_ptr.vmem [resolvable:$true] %s153
          %159 = dma.hbm_to_vmem [thread:$0]  %s1, 2048, %s154, [#allocation6], 64, 64, 4
        $region16: #{tpu_custom_call.1} parent=11 // pred_fallthru
          _
        // Predicated region
        $region17: #{tpu_custom_call.1} parent=11 // pred_check
          %p160 = pneg %p85
        $region18: #{tpu_custom_call.1} parent=11 // pred_check_branch
          %162 = sbr.rel (%p160) target = $region20
        $region19: #{tpu_custom_call.1} parent=11 // pred_region
          %s164 = ssub.s32 1024, 1024
          %165 = vsyncadd [#allocation6], %s164
          %s166 = sshll.u32 [#allocation7], 4
          %s167 = int_to_ptr.vmem [resolvable:$true] %s166
          %172 = dma.hbm_to_vmem [thread:$0]  %s2, 1024, %s167, [#allocation6], 64, 64, 4
        $region20: #{tpu_custom_call.1} parent=11 // pred_fallthru
          _
        // Predicated region
        $region21: #{tpu_custom_call.1} parent=11 // pred_check
          %p173 = pneg %p106
        $region22: #{tpu_custom_call.1} parent=11 // pred_check_branch
          %175 = sbr.rel (%p173) target = $region24
        $region23: #{tpu_custom_call.1} parent=11 // pred_region
          _
        $region24: #{tpu_custom_call.1} parent=11 // pred_fallthru
          _
      $region12: #{tpu_custom_call.1} parent=5 // pred_fallthru
        _
      %p176 = scmp.lt.s32.totalorder %s17, 4
      // Predicated region
      $region25: #{tpu_custom_call.1} parent=5 // pred_check
        %p177 = pneg %p176
      $region26: #{tpu_custom_call.1} parent=5 // pred_check_branch
        %179 = sbr.rel (%p177) target = $region28
      $region27: #{tpu_custom_call.1} parent=5 // pred_region
        // Predicated region
        $region29: #{tpu_custom_call.1} parent=27 // pred_check
          %p180 = pneg %p37
        $region30: #{tpu_custom_call.1} parent=27 // pred_check_branch
          %182 = sbr.rel (%p180) target = $region32
        $region31: #{tpu_custom_call.1} parent=27 // pred_region
          %s183 = sand.u32 %s27, 1
          %s184 = scalar_lea.sflag [#allocation3], %s183
          %s185 = sand.u32 %s27, 1
          %s186 = smul.addr %s185, 512
          %s187 = scalar_lea.vmem [#allocation2], %s186
          %s188 = smul.u32 64, %s17
          %s190 = ssub.s32 8192, 8192
          %191 = vsyncadd %s184, %s190
          %s192 = smul.addr %s188, 2
          %s193 = smul.addr %s192, 64
          %s194 = scalar_lea.hbm %s0, %s193
          %s195 = sshll.u32 %s187, 4
          %s196 = int_to_ptr.vmem [resolvable:$true] %s195
          %201 = dma.hbm_to_vmem [thread:$0]  %s194, 8192, %s196, %s184, 128, 128, 8
        $region32: #{tpu_custom_call.1} parent=27 // pred_fallthru
          _
      $region28: #{tpu_custom_call.1} parent=5 // pred_fallthru
        _
      %p202 = scmp.le.s32.totalorder 1, %s17
      %p203 = scmp.lt.s32.totalorder %s17, 5
      %p204 = pnand %p202, %p203
      %p205 = pneg %p204
      // Predicated region
      $region33: #{tpu_custom_call.1} parent=5 // pred_check
        _
      $region34: #{tpu_custom_call.1} parent=5 // pred_check_branch
        %207 = sbr.rel (%p204) target = $region36
      $region35: #{tpu_custom_call.1} parent=5 // pred_region
        %s208 = ssub.s32 %s17, 1
        %s209 = sand.u32 %s30, 1
        %s210 = scalar_lea.sflag [#allocation3], %s209
        %s211 = sand.u32 %s30, 1
        %s212 = smul.addr %s211, 512
        %s213 = scalar_lea.vmem [#allocation2], %s212
        // Predicated region
        $region37: #{tpu_custom_call.1} parent=35 // pred_check
          %p214 = pneg %p43
        $region38: #{tpu_custom_call.1} parent=35 // pred_check_branch
          %216 = sbr.rel (%p214) target = $region40
        $region39: #{tpu_custom_call.1} parent=35 // pred_region
          %217 = dma.done %s210, 8192
        $region40: #{tpu_custom_call.1} parent=35 // pred_fallthru
          _
        // Predicated region
        $region41: #{tpu_custom_call.1} parent=35 // pred_check
          %p218 = pneg %p64
        $region42: #{tpu_custom_call.1} parent=35 // pred_check_branch
          %220 = sbr.rel (%p218) target = $region44
        $region43: #{tpu_custom_call.1} parent=35 // pred_region
          %221 = dma.done [#allocation6], 2048
        $region44: #{tpu_custom_call.1} parent=35 // pred_fallthru
          _
        // Predicated region
        $region45: #{tpu_custom_call.1} parent=35 // pred_check
          %p222 = pneg %p85
        $region46: #{tpu_custom_call.1} parent=35 // pred_check_branch
          %224 = sbr.rel (%p222) target = $region48
        $region47: #{tpu_custom_call.1} parent=35 // pred_region
          %225 = dma.done [#allocation6], 1024
        $region48: #{tpu_custom_call.1} parent=35 // pred_fallthru
          _
        %s226 = sand.u32 %s30, 1
        %s227 = scalar_lea.sflag [#allocation3], %s226
        %s228 = sand.u32 %s30, 1
        %s229 = smul.addr %s228, 512
        %s230 = scalar_lea.vmem [#allocation2], %s229
        %p231 = pneg %p43
        %p232 = pneg %p40
        %p233 = pneg %p64
        %p234 = pneg %p61
        %p235 = pneg %p85
        %p236 = pneg %p82
        %p237 = pneg %p106
        %p238 = pneg %p103
        %p239 = pneg %p132
        %p240 = pneg %p129
        %s241 = sand.u32 %s119, 1
        %s242 = scalar_lea.sflag [#allocation4], %s241
        %s243 = sand.u32 %s119, 1
        %s244 = smul.addr %s243, 128
        %s245 = scalar_lea.vmem [#allocation8], %s244
        %s246 = smul.u32 64, %s22
        %s247 = smul.u32 16, %s22
        %v249 = vld [vmem:[%s213] sm:$0xff]
        %v250 = vld [vmem:[%s213 + $0x8] sm:$0xff]
        %v251 = vld [vmem:[%s213 + $0x10] sm:$0xff]
        %v252 = vld [vmem:[%s213 + $0x18] sm:$0xff]
        %v253 = vld [vmem:[%s213 + $0x20] sm:$0xff]
        %v254 = vld [vmem:[%s213 + $0x28] sm:$0xff]
        %v255 = vld [vmem:[%s213 + $0x30] sm:$0xff]
        %v256 = vld [vmem:[%s213 + $0x38] sm:$0xff]
        %v257 = vld [vmem:[%s213 + $0x40] sm:$0xff]
        %v258 = vld [vmem:[%s213 + $0x48] sm:$0xff]
        %v259 = vld [vmem:[%s213 + $0x50] sm:$0xff]
        %v260 = vld [vmem:[%s213 + $0x58] sm:$0xff]
        %v261 = vld [vmem:[%s213 + $0x60] sm:$0xff]
        %v262 = vld [vmem:[%s213 + $0x68] sm:$0xff]
        %v263 = vld [vmem:[%s213 + $0x70] sm:$0xff]
        %v264 = vld [vmem:[%s213 + $0x78] sm:$0xff]
        %v265 = vld [vmem:[%s213 + $0x80] sm:$0xff]
        %v266 = vld [vmem:[%s213 + $0x88] sm:$0xff]
        %v267 = vld [vmem:[%s213 + $0x90] sm:$0xff]
        %v268 = vld [vmem:[%s213 + $0x98] sm:$0xff]
        %v269 = vld [vmem:[%s213 + $0xa0] sm:$0xff]
        %v270 = vld [vmem:[%s213 + $0xa8] sm:$0xff]
        %v271 = vld [vmem:[%s213 + $0xb0] sm:$0xff]
        %v272 = vld [vmem:[%s213 + $0xb8] sm:$0xff]
        %v273 = vld [vmem:[%s213 + $0xc0] sm:$0xff]
        %v274 = vld [vmem:[%s213 + $0xc8] sm:$0xff]
        %v275 = vld [vmem:[%s213 + $0xd0] sm:$0xff]
        %v276 = vld [vmem:[%s213 + $0xd8] sm:$0xff]
        %v277 = vld [vmem:[%s213 + $0xe0] sm:$0xff]
        %v278 = vld [vmem:[%s213 + $0xe8] sm:$0xff]
        %v279 = vld [vmem:[%s213 + $0xf0] sm:$0xff]
        %v280 = vld [vmem:[%s213 + $0xf8] sm:$0xff]
        %v281 = vld [vmem:[%s213 + $0x100] sm:$0xff]
        %v282 = vld [vmem:[%s213 + $0x108] sm:$0xff]
        %v283 = vld [vmem:[%s213 + $0x110] sm:$0xff]
        %v284 = vld [vmem:[%s213 + $0x118] sm:$0xff]
        %v285 = vld [vmem:[%s213 + $0x120] sm:$0xff]
        %v286 = vld [vmem:[%s213 + $0x128] sm:$0xff]
        %v287 = vld [vmem:[%s213 + $0x130] sm:$0xff]
        %v288 = vld [vmem:[%s213 + $0x138] sm:$0xff]
        %v289 = vld [vmem:[%s213 + $0x140] sm:$0xff]
        %v290 = vld [vmem:[%s213 + $0x148] sm:$0xff]
        %v291 = vld [vmem:[%s213 + $0x150] sm:$0xff]
        %v292 = vld [vmem:[%s213 + $0x158] sm:$0xff]
        %v293 = vld [vmem:[%s213 + $0x160] sm:$0xff]
        %v294 = vld [vmem:[%s213 + $0x168] sm:$0xff]
        %v295 = vld [vmem:[%s213 + $0x170] sm:$0xff]
        %v296 = vld [vmem:[%s213 + $0x178] sm:$0xff]
        %v297 = vld [vmem:[%s213 + $0x180] sm:$0xff]
        %v298 = vld [vmem:[%s213 + $0x188] sm:$0xff]
        %v299 = vld [vmem:[%s213 + $0x190] sm:$0xff]
        %v300 = vld [vmem:[%s213 + $0x198] sm:$0xff]
        %v301 = vld [vmem:[%s213 + $0x1a0] sm:$0xff]
        %v302 = vld [vmem:[%s213 + $0x1a8] sm:$0xff]
        %v303 = vld [vmem:[%s213 + $0x1b0] sm:$0xff]
        %v304 = vld [vmem:[%s213 + $0x1b8] sm:$0xff]
        %v305 = vld [vmem:[%s213 + $0x1c0] sm:$0xff]
        %v306 = vld [vmem:[%s213 + $0x1c8] sm:$0xff]
        %v307 = vld [vmem:[%s213 + $0x1d0] sm:$0xff]
        %v308 = vld [vmem:[%s213 + $0x1d8] sm:$0xff]
        %v309 = vld [vmem:[%s213 + $0x1e0] sm:$0xff]
        %v310 = vld [vmem:[%s213 + $0x1e8] sm:$0xff]
        %v311 = vld [vmem:[%s213 + $0x1f0] sm:$0xff]
        %v312 = vld [vmem:[%s213 + $0x1f8] sm:$0xff]
        %v313 = vld [vmem:[#allocation5] sm:$0xf]
        %v314 = vld [vmem:[#allocation5 + $0x4] sm:$0xf]
        %v315 = vld [vmem:[#allocation5 + $0x8] sm:$0xf]
        %v316 = vld [vmem:[#allocation5 + $0xc] sm:$0xf]
        %v317 = vld [vmem:[#allocation5 + $0x10] sm:$0xf]
        %v318 = vld [vmem:[#allocation5 + $0x14] sm:$0xf]
        %v319 = vld [vmem:[#allocation5 + $0x18] sm:$0xf]
        %v320 = vld [vmem:[#allocation5 + $0x1c] sm:$0xf]
        %v321 = vld [vmem:[#allocation5 + $0x20] sm:$0xf]
        %v322 = vld [vmem:[#allocation5 + $0x24] sm:$0xf]
        %v323 = vld [vmem:[#allocation5 + $0x28] sm:$0xf]
        %v324 = vld [vmem:[#allocation5 + $0x2c] sm:$0xf]
        %v325 = vld [vmem:[#allocation5 + $0x30] sm:$0xf]
        %v326 = vld [vmem:[#allocation5 + $0x34] sm:$0xf]
        %v327 = vld [vmem:[#allocation5 + $0x38] sm:$0xf]
        %v328 = vld [vmem:[#allocation5 + $0x3c] sm:$0xf]
        %v329 = vld [vmem:[#allocation5 + $0x40] sm:$0xf]
        %v330 = vld [vmem:[#allocation5 + $0x44] sm:$0xf]
        %v331 = vld [vmem:[#allocation5 + $0x48] sm:$0xf]
        %v332 = vld [vmem:[#allocation5 + $0x4c] sm:$0xf]
        %v333 = vld [vmem:[#allocation5 + $0x50] sm:$0xf]
        %v334 = vld [vmem:[#allocation5 + $0x54] sm:$0xf]
        %v335 = vld [vmem:[#allocation5 + $0x58] sm:$0xf]
        %v336 = vld [vmem:[#allocation5 + $0x5c] sm:$0xf]
        %v337 = vld [vmem:[#allocation5 + $0x60] sm:$0xf]
        %v338 = vld [vmem:[#allocation5 + $0x64] sm:$0xf]
        %v339 = vld [vmem:[#allocation5 + $0x68] sm:$0xf]
        %v340 = vld [vmem:[#allocation5 + $0x6c] sm:$0xf]
        %v341 = vld [vmem:[#allocation5 + $0x70] sm:$0xf]
        %v342 = vld [vmem:[#allocation5 + $0x74] sm:$0xf]
        %v343 = vld [vmem:[#allocation5 + $0x78] sm:$0xf]
        %v344 = vld [vmem:[#allocation5 + $0x7c] sm:$0xf]
        %v409 = vunpack.c.l.b16 %v249
        %v410 = vunpack.c.h.b16 %v249
        %v411 = vunpack.c.l.b16 %v250
        %v412 = vunpack.c.h.b16 %v250
        %v413 = vunpack.c.l.b16 %v251
        %v414 = vunpack.c.h.b16 %v251
        %v415 = vunpack.c.l.b16 %v252
        %v416 = vunpack.c.h.b16 %v252
        %v417 = vunpack.c.l.b16 %v253
        %v418 = vunpack.c.h.b16 %v253
        %v419 = vunpack.c.l.b16 %v254
        %v420 = vunpack.c.h.b16 %v254
        %v421 = vunpack.c.l.b16 %v255
        %v422 = vunpack.c.h.b16 %v255
        %v423 = vunpack.c.l.b16 %v256
        %v424 = vunpack.c.h.b16 %v256
        %v425 = vunpack.c.l.b16 %v257
        %v426 = vunpack.c.h.b16 %v257
        %v427 = vunpack.c.l.b16 %v258
        %v428 = vunpack.c.h.b16 %v258
        %v429 = vunpack.c.l.b16 %v259
        %v430 = vunpack.c.h.b16 %v259
        %v431 = vunpack.c.l.b16 %v260
        %v432 = vunpack.c.h.b16 %v260
        %v433 = vunpack.c.l.b16 %v261
        %v434 = vunpack.c.h.b16 %v261
        %v435 = vunpack.c.l.b16 %v262
        %v436 = vunpack.c.h.b16 %v262
        %v437 = vunpack.c.l.b16 %v263
        %v438 = vunpack.c.h.b16 %v263
        %v439 = vunpack.c.l.b16 %v264
        %v440 = vunpack.c.h.b16 %v264
        %v441 = vunpack.c.l.b16 %v265
        %v442 = vunpack.c.h.b16 %v265
        %v443 = vunpack.c.l.b16 %v266
        %v444 = vunpack.c.h.b16 %v266
        %v445 = vunpack.c.l.b16 %v267
        %v446 = vunpack.c.h.b16 %v267
        %v447 = vunpack.c.l.b16 %v268
        %v448 = vunpack.c.h.b16 %v268
        %v449 = vunpack.c.l.b16 %v269
        %v450 = vunpack.c.h.b16 %v269
        %v451 = vunpack.c.l.b16 %v270
        %v452 = vunpack.c.h.b16 %v270
        %v453 = vunpack.c.l.b16 %v271
        %v454 = vunpack.c.h.b16 %v271
        %v455 = vunpack.c.l.b16 %v272
        %v456 = vunpack.c.h.b16 %v272
        %v457 = vunpack.c.l.b16 %v273
        %v458 = vunpack.c.h.b16 %v273
        %v459 = vunpack.c.l.b16 %v274
        %v460 = vunpack.c.h.b16 %v274
        %v461 = vunpack.c.l.b16 %v275
        %v462 = vunpack.c.h.b16 %v275
        %v463 = vunpack.c.l.b16 %v276
        %v464 = vunpack.c.h.b16 %v276
        %v465 = vunpack.c.l.b16 %v277
        %v466 = vunpack.c.h.b16 %v277
        %v467 = vunpack.c.l.b16 %v278
        %v468 = vunpack.c.h.b16 %v278
        %v469 = vunpack.c.l.b16 %v279
        %v470 = vunpack.c.h.b16 %v279
        %v471 = vunpack.c.l.b16 %v280
        %v472 = vunpack.c.h.b16 %v280
        %v473 = vunpack.c.l.b16 %v281
        %v474 = vunpack.c.h.b16 %v281
        %v475 = vunpack.c.l.b16 %v282
        %v476 = vunpack.c.h.b16 %v282
        %v477 = vunpack.c.l.b16 %v283
        %v478 = vunpack.c.h.b16 %v283
        %v479 = vunpack.c.l.b16 %v284
        %v480 = vunpack.c.h.b16 %v284
        %v481 = vunpack.c.l.b16 %v285
        %v482 = vunpack.c.h.b16 %v285
        %v483 = vunpack.c.l.b16 %v286
        %v484 = vunpack.c.h.b16 %v286
        %v485 = vunpack.c.l.b16 %v287
        %v486 = vunpack.c.h.b16 %v287
        %v487 = vunpack.c.l.b16 %v288
        %v488 = vunpack.c.h.b16 %v288
        %v489 = vunpack.c.l.b16 %v289
        %v490 = vunpack.c.h.b16 %v289
        %v491 = vunpack.c.l.b16 %v290
        %v492 = vunpack.c.h.b16 %v290
        %v493 = vunpack.c.l.b16 %v291
        %v494 = vunpack.c.h.b16 %v291
        %v495 = vunpack.c.l.b16 %v292
        %v496 = vunpack.c.h.b16 %v292
        %v497 = vunpack.c.l.b16 %v293
        %v498 = vunpack.c.h.b16 %v293
        %v499 = vunpack.c.l.b16 %v294
        %v500 = vunpack.c.h.b16 %v294
        %v501 = vunpack.c.l.b16 %v295
        %v502 = vunpack.c.h.b16 %v295
        %v503 = vunpack.c.l.b16 %v296
        %v504 = vunpack.c.h.b16 %v296
        %v505 = vunpack.c.l.b16 %v297
        %v506 = vunpack.c.h.b16 %v297
        %v507 = vunpack.c.l.b16 %v298
        %v508 = vunpack.c.h.b16 %v298
        %v509 = vunpack.c.l.b16 %v299
        %v510 = vunpack.c.h.b16 %v299
        %v511 = vunpack.c.l.b16 %v300
        %v512 = vunpack.c.h.b16 %v300
        %v513 = vunpack.c.l.b16 %v301
        %v514 = vunpack.c.h.b16 %v301
        %v515 = vunpack.c.l.b16 %v302
        %v516 = vunpack.c.h.b16 %v302
        %v517 = vunpack.c.l.b16 %v303
        %v518 = vunpack.c.h.b16 %v303
        %v519 = vunpack.c.l.b16 %v304
        %v520 = vunpack.c.h.b16 %v304
        %v521 = vunpack.c.l.b16 %v305
        %v522 = vunpack.c.h.b16 %v305
        %v523 = vunpack.c.l.b16 %v306
        %v524 = vunpack.c.h.b16 %v306
        %v525 = vunpack.c.l.b16 %v307
        %v526 = vunpack.c.h.b16 %v307
        %v527 = vunpack.c.l.b16 %v308
        %v528 = vunpack.c.h.b16 %v308
        %v529 = vunpack.c.l.b16 %v309
        %v530 = vunpack.c.h.b16 %v309
        %v531 = vunpack.c.l.b16 %v310
        %v532 = vunpack.c.h.b16 %v310
        %v533 = vunpack.c.l.b16 %v311
        %v534 = vunpack.c.h.b16 %v311
        %v535 = vunpack.c.l.b16 %v312
        %v536 = vunpack.c.h.b16 %v312
        %v537 = vpack.c.b16 %v411, %v409
        %v538 = vpack.c.b16 %v412, %v410
        %v539 = vpack.c.b16 %v415, %v413
        %v540 = vpack.c.b16 %v416, %v414
        %v541 = vpack.c.b16 %v419, %v417
        %v542 = vpack.c.b16 %v420, %v418
        %v543 = vpack.c.b16 %v423, %v421
        %v544 = vpack.c.b16 %v424, %v422
        %v545 = vpack.c.b16 %v427, %v425
        %v546 = vpack.c.b16 %v428, %v426
        %v547 = vpack.c.b16 %v431, %v429
        %v548 = vpack.c.b16 %v432, %v430
        %v549 = vpack.c.b16 %v435, %v433
        %v550 = vpack.c.b16 %v436, %v434
        %v551 = vpack.c.b16 %v439, %v437
        %v552 = vpack.c.b16 %v440, %v438
        %v553 = vpack.c.b16 %v443, %v441
        %v554 = vpack.c.b16 %v444, %v442
        %v555 = vpack.c.b16 %v447, %v445
        %v556 = vpack.c.b16 %v448, %v446
        %v557 = vpack.c.b16 %v451, %v449
        %v558 = vpack.c.b16 %v452, %v450
        %v559 = vpack.c.b16 %v455, %v453
        %v560 = vpack.c.b16 %v456, %v454
        %v561 = vpack.c.b16 %v459, %v457
        %v562 = vpack.c.b16 %v460, %v458
        %v563 = vpack.c.b16 %v463, %v461
        %v564 = vpack.c.b16 %v464, %v462
        %v565 = vpack.c.b16 %v467, %v465
        %v566 = vpack.c.b16 %v468, %v466
        %v567 = vpack.c.b16 %v471, %v469
        %v568 = vpack.c.b16 %v472, %v470
        %v569 = vpack.c.b16 %v475, %v473
        %v570 = vpack.c.b16 %v476, %v474
        %v571 = vpack.c.b16 %v479, %v477
        %v572 = vpack.c.b16 %v480, %v478
        %v573 = vpack.c.b16 %v483, %v481
        %v574 = vpack.c.b16 %v484, %v482
        %v575 = vpack.c.b16 %v487, %v485
        %v576 = vpack.c.b16 %v488, %v486
        %v577 = vpack.c.b16 %v491, %v489
        %v578 = vpack.c.b16 %v492, %v490
        %v579 = vpack.c.b16 %v495, %v493
        %v580 = vpack.c.b16 %v496, %v494
        %v581 = vpack.c.b16 %v499, %v497
        %v582 = vpack.c.b16 %v500, %v498
        %v583 = vpack.c.b16 %v503, %v501
        %v584 = vpack.c.b16 %v504, %v502
        %v585 = vpack.c.b16 %v507, %v505
        %v586 = vpack.c.b16 %v508, %v506
        %v587 = vpack.c.b16 %v511, %v509
        %v588 = vpack.c.b16 %v512, %v510
        %v589 = vpack.c.b16 %v515, %v513
        %v590 = vpack.c.b16 %v516, %v514
        %v591 = vpack.c.b16 %v519, %v517
        %v592 = vpack.c.b16 %v520, %v518
        %v593 = vpack.c.b16 %v523, %v521
        %v594 = vpack.c.b16 %v524, %v522
        %v595 = vpack.c.b16 %v527, %v525
        %v596 = vpack.c.b16 %v528, %v526
        %v597 = vpack.c.b16 %v531, %v529
        %v598 = vpack.c.b16 %v532, %v530
        %v599 = vpack.c.b16 %v535, %v533
        %v600 = vpack.c.b16 %v536, %v534
        %v697 = vunpack.c.l.b16 %v313
        %v698 = vunpack.c.l.b16 %v314
        %v699 = vunpack.c.l.b16 %v315
        %v700 = vunpack.c.l.b16 %v316
        %v701 = vunpack.c.l.b16 %v317
        %v702 = vunpack.c.l.b16 %v318
        %v703 = vunpack.c.l.b16 %v319
        %v704 = vunpack.c.l.b16 %v320
        %v705 = vunpack.c.l.b16 %v321
        %v706 = vunpack.c.l.b16 %v322
        %v707 = vunpack.c.l.b16 %v323
        %v708 = vunpack.c.l.b16 %v324
        %v709 = vunpack.c.l.b16 %v325
        %v710 = vunpack.c.l.b16 %v326
        %v711 = vunpack.c.l.b16 %v327
        %v712 = vunpack.c.l.b16 %v328
        %v713 = vunpack.c.l.b16 %v329
        %v714 = vunpack.c.l.b16 %v330
        %v715 = vunpack.c.l.b16 %v331
        %v716 = vunpack.c.l.b16 %v332
        %v717 = vunpack.c.l.b16 %v333
        %v718 = vunpack.c.l.b16 %v334
        %v719 = vunpack.c.l.b16 %v335
        %v720 = vunpack.c.l.b16 %v336
        %v721 = vunpack.c.l.b16 %v337
        %v722 = vunpack.c.l.b16 %v338
        %v723 = vunpack.c.l.b16 %v339
        %v724 = vunpack.c.l.b16 %v340
        %v725 = vunpack.c.l.b16 %v341
        %v726 = vunpack.c.l.b16 %v342
        %v727 = vunpack.c.l.b16 %v343
        %v728 = vunpack.c.l.b16 %v344
        %v729 = vpack.c.b16 %v698, %v697
        %v730 = vpack.c.b16 %v700, %v699
        %v731 = vpack.c.b16 %v702, %v701
        %v732 = vpack.c.b16 %v704, %v703
        %v733 = vpack.c.b16 %v706, %v705
        %v734 = vpack.c.b16 %v708, %v707
        %v735 = vpack.c.b16 %v710, %v709
        %v736 = vpack.c.b16 %v712, %v711
        %v737 = vpack.c.b16 %v714, %v713
        %v738 = vpack.c.b16 %v716, %v715
        %v739 = vpack.c.b16 %v718, %v717
        %v740 = vpack.c.b16 %v720, %v719
        %v741 = vpack.c.b16 %v722, %v721
        %v742 = vpack.c.b16 %v724, %v723
        %v743 = vpack.c.b16 %v726, %v725
        %v744 = vpack.c.b16 %v728, %v727
        %761 = vmatprep.subr.bf16.mxu0 0
        %762 = vmatpush1.bf16.msra.mxu0 %v729
        %763 = vmatprep.subr.bf16.mxu0 0
        %764 = vmatpush1.bf16.msra.mxu0 %v730
        %765 = vmatprep.subr.bf16.mxu0 0
        %766 = vmatpush1.bf16.msra.mxu0 %v731
        %767 = vmatprep.subr.bf16.mxu0 0
        %768 = vmatpush1.bf16.msra.mxu0 %v732
        %769 = vmatprep.subr.bf16.mxu0 0
        %770 = vmatpush1.bf16.msra.mxu0 %v733
        %771 = vmatprep.subr.bf16.mxu0 0
        %772 = vmatpush1.bf16.msra.mxu0 %v734
        %773 = vmatprep.subr.bf16.mxu0 0
        %774 = vmatpush1.bf16.msra.mxu0 %v735
        %775 = vmatprep.subr.bf16.mxu0 0
        %776 = vmatpush1.bf16.msra.mxu0 %v736
        %777 = vmatprep.subr.bf16.mxu0 0
        %778 = vmatpush1.bf16.msra.mxu0 %v737
        %779 = vmatprep.subr.bf16.mxu0 0
        %780 = vmatpush1.bf16.msra.mxu0 %v738
        %781 = vmatprep.subr.bf16.mxu0 0
        %782 = vmatpush1.bf16.msra.mxu0 %v739
        %783 = vmatprep.subr.bf16.mxu0 0
        %784 = vmatpush1.bf16.msra.mxu0 %v740
        %785 = vmatprep.subr.bf16.mxu0 0
        %786 = vmatpush1.bf16.msra.mxu0 %v741
        %787 = vmatprep.subr.bf16.mxu0 0
        %788 = vmatpush1.bf16.msra.mxu0 %v742
        %789 = vmatprep.subr.bf16.mxu0 0
        %790 = vmatpush1.bf16.msra.mxu0 %v743
        %791 = vmatprep.subr.bf16.mxu0 0
        %792 = vmatpush1.bf16.msra.mxu0 %v744
        %793 = vmatprep.mubr.bf16.mxu0 %v538
        %794 = vmatmul.mubr.bf16.gmra.mrb[0].mxu0 %v537
        %v795 = vpop.f32.mrb[0].mxu0
        %v796 = vadd.f32 0.0, %v795
        %v797 = vpop.f32.mrb[0].mxu0
        %v798 = vpop.f32.mrb[0].mxu0
        %v799 = vadd.f32 0.0, %v798
        %v800 = vpop.f32.mrb[0].mxu0
        %801 = vmatprep.mubr.bf16.mxu0 %v540
        %802 = vmatmul.mubr.bf16.gmra.mrb[0].mxu0 %v539
        %v803 = vpop.f32.mrb[0].mxu0
        %v804 = vadd.f32 0.0, %v803
        %v805 = vpop.f32.mrb[0].mxu0
        %v806 = vpop.f32.mrb[0].mxu0
        %v807 = vadd.f32 0.0, %v806
        %v808 = vpop.f32.mrb[0].mxu0
        %809 = vmatprep.mubr.bf16.mxu0 %v542
        %810 = vmatmul.mubr.bf16.gmra.mrb[0].mxu0 %v541
        %v811 = vpop.f32.mrb[0].mxu0
        %v812 = vadd.f32 0.0, %v811
        %v813 = vpop.f32.mrb[0].mxu0
        %v814 = vpop.f32.mrb[0].mxu0
        %v815 = vadd.f32 0.0, %v814
        %v816 = vpop.f32.mrb[0].mxu0
        %817 = vmatprep.mubr.bf16.mxu0 %v544
        %818 = vmatmul.mubr.bf16.gmra.mrb[0].mxu0 %v543
        %v819 = vpop.f32.mrb[0].mxu0
        %v820 = vadd.f32 0.0, %v819
        %v821 = vpop.f32.mrb[0].mxu0
        %v822 = vpop.f32.mrb[0].mxu0
        %v823 = vadd.f32 0.0, %v822
        %v824 = vpop.f32.mrb[0].mxu0
        %825 = vmatprep.mubr.bf16.mxu0 %v546
        %826 = vmatmul.mubr.bf16.gmra.mrb[0].mxu0 %v545
        %v827 = vpop.f32.mrb[0].mxu0
        %v828 = vadd.f32 0.0, %v827
        %v829 = vpop.f32.mrb[0].mxu0
        %v830 = vpop.f32.mrb[0].mxu0
        %v831 = vadd.f32 0.0, %v830
        %v832 = vpop.f32.mrb[0].mxu0
        %833 = vmatprep.mubr.bf16.mxu0 %v548
        %834 = vmatmul.mubr.bf16.gmra.mrb[0].mxu0 %v547
        %v835 = vpop.f32.mrb[0].mxu0
        %v836 = vadd.f32 0.0, %v835
        %v837 = vpop.f32.mrb[0].mxu0
        %v838 = vpop.f32.mrb[0].mxu0
        %v839 = vadd.f32 0.0, %v838
        %v840 = vpop.f32.mrb[0].mxu0
        %841 = vmatprep.mubr.bf16.mxu0 %v550
        %842 = vmatmul.mubr.bf16.gmra.mrb[0].mxu0 %v549
        %v843 = vpop.f32.mrb[0].mxu0
        %v844 = vadd.f32 0.0, %v843
        %v845 = vpop.f32.mrb[0].mxu0
        %v846 = vpop.f32.mrb[0].mxu0
        %v847 = vadd.f32 0.0, %v846
        %v848 = vpop.f32.mrb[0].mxu0
        %849 = vmatprep.mubr.bf16.mxu0 %v552
        %850 = vmatmul.mubr.bf16.gmra.mrb[0].mxu0 %v551
        %v851 = vpop.f32.mrb[0].mxu0
        %v852 = vadd.f32 0.0, %v851
        %v853 = vpop.f32.mrb[0].mxu0
        %v854 = vpop.f32.mrb[0].mxu0
        %v855 = vadd.f32 0.0, %v854
        %v856 = vpop.f32.mrb[0].mxu0
        %857 = vmatprep.mubr.bf16.mxu0 %v554
        %858 = vmatmul.mubr.bf16.gmra.mrb[0].mxu0 %v553
        %v859 = vpop.f32.mrb[0].mxu0
        %v860 = vadd.f32 0.0, %v859
        %v861 = vpop.f32.mrb[0].mxu0
        %v862 = vpop.f32.mrb[0].mxu0
        %v863 = vadd.f32 0.0, %v862
        %v864 = vpop.f32.mrb[0].mxu0
        %865 = vmatprep.mubr.bf16.mxu0 %v556
        %866 = vmatmul.mubr.bf16.gmra.mrb[0].mxu0 %v555
        %v867 = vpop.f32.mrb[0].mxu0
        %v868 = vadd.f32 0.0, %v867
        %v869 = vpop.f32.mrb[0].mxu0
        %v870 = vpop.f32.mrb[0].mxu0
        %v871 = vadd.f32 0.0, %v870
        %v872 = vpop.f32.mrb[0].mxu0
        %873 = vmatprep.mubr.bf16.mxu0 %v558
        %874 = vmatmul.mubr.bf16.gmra.mrb[0].mxu0 %v557
        %v875 = vpop.f32.mrb[0].mxu0
        %v876 = vadd.f32 0.0, %v875
        %v877 = vpop.f32.mrb[0].mxu0
        %v878 = vpop.f32.mrb[0].mxu0
        %v879 = vadd.f32 0.0, %v878
        %v880 = vpop.f32.mrb[0].mxu0
        %881 = vmatprep.mubr.bf16.mxu0 %v560
        %882 = vmatmul.mubr.bf16.gmra.mrb[0].mxu0 %v559
        %v883 = vpop.f32.mrb[0].mxu0
        %v884 = vadd.f32 0.0, %v883
        %v885 = vpop.f32.mrb[0].mxu0
        %v886 = vpop.f32.mrb[0].mxu0
        %v887 = vadd.f32 0.0, %v886
        %v888 = vpop.f32.mrb[0].mxu0
        %889 = vmatprep.mubr.bf16.mxu0 %v562
        %890 = vmatmul.mubr.bf16.gmra.mrb[0].mxu0 %v561
        %v891 = vpop.f32.mrb[0].mxu0
        %v892 = vadd.f32 0.0, %v891
        %v893 = vpop.f32.mrb[0].mxu0
        %v894 = vpop.f32.mrb[0].mxu0
        %v895 = vadd.f32 0.0, %v894
        %v896 = vpop.f32.mrb[0].mxu0
        %897 = vmatprep.mubr.bf16.mxu0 %v564
        %898 = vmatmul.mubr.bf16.gmra.mrb[0].mxu0 %v563
        %v899 = vpop.f32.mrb[0].mxu0
        %v900 = vadd.f32 0.0, %v899
        %v901 = vpop.f32.mrb[0].mxu0
        %v902 = vpop.f32.mrb[0].mxu0
        %v903 = vadd.f32 0.0, %v902
        %v904 = vpop.f32.mrb[0].mxu0
        %905 = vmatprep.mubr.bf16.mxu0 %v566
        %906 = vmatmul.mubr.bf16.gmra.mrb[0].mxu0 %v565
        %v907 = vpop.f32.mrb[0].mxu0
        %v908 = vadd.f32 0.0, %v907
        %v909 = vpop.f32.mrb[0].mxu0
        %v910 = vpop.f32.mrb[0].mxu0
        %v911 = vadd.f32 0.0, %v910
        %v912 = vpop.f32.mrb[0].mxu0
        %913 = vmatprep.mubr.bf16.mxu0 %v568
        %914 = vmatmul.mubr.bf16.gmra.mrb[0].mxu0 %v567
        %v915 = vpop.f32.mrb[0].mxu0
        %v916 = vadd.f32 0.0, %v915
        %v917 = vpop.f32.mrb[0].mxu0
        %v918 = vpop.f32.mrb[0].mxu0
        %v919 = vadd.f32 0.0, %v918
        %v920 = vpop.f32.mrb[0].mxu0
        %921 = vmatprep.mubr.bf16.mxu0 %v570
        %922 = vmatmul.mubr.bf16.gmra.mrb[0].mxu0 %v569
        %v923 = vpop.f32.mrb[0].mxu0
        %v924 = vadd.f32 0.0, %v923
        %v925 = vpop.f32.mrb[0].mxu0
        %v926 = vpop.f32.mrb[0].mxu0
        %v927 = vadd.f32 0.0, %v926
        %v928 = vpop.f32.mrb[0].mxu0
        %929 = vmatprep.mubr.bf16.mxu0 %v572
        %930 = vmatmul.mubr.bf16.gmra.mrb[0].mxu0 %v571
        %v931 = vpop.f32.mrb[0].mxu0
        %v932 = vadd.f32 0.0, %v931
        %v933 = vpop.f32.mrb[0].mxu0
        %v934 = vpop.f32.mrb[0].mxu0
        %v935 = vadd.f32 0.0, %v934
        %v936 = vpop.f32.mrb[0].mxu0
        %937 = vmatprep.mubr.bf16.mxu0 %v574
        %938 = vmatmul.mubr.bf16.gmra.mrb[0].mxu0 %v573
        %v939 = vpop.f32.mrb[0].mxu0
        %v940 = vadd.f32 0.0, %v939
        %v941 = vpop.f32.mrb[0].mxu0
        %v942 = vpop.f32.mrb[0].mxu0
        %v943 = vadd.f32 0.0, %v942
        %v944 = vpop.f32.mrb[0].mxu0
        %945 = vmatprep.mubr.bf16.mxu0 %v576
        %946 = vmatmul.mubr.bf16.gmra.mrb[0].mxu0 %v575
        %v947 = vpop.f32.mrb[0].mxu0
        %v948 = vadd.f32 0.0, %v947
        %v949 = vpop.f32.mrb[0].mxu0
        %v950 = vpop.f32.mrb[0].mxu0
        %v951 = vadd.f32 0.0, %v950
        %v952 = vpop.f32.mrb[0].mxu0
        %953 = vmatprep.mubr.bf16.mxu0 %v578
        %954 = vmatmul.mubr.bf16.gmra.mrb[0].mxu0 %v577
        %v955 = vpop.f32.mrb[0].mxu0
        %v956 = vadd.f32 0.0, %v955
        %v957 = vpop.f32.mrb[0].mxu0
        %v958 = vpop.f32.mrb[0].mxu0
        %v959 = vadd.f32 0.0, %v958
        %v960 = vpop.f32.mrb[0].mxu0
        %961 = vmatprep.mubr.bf16.mxu0 %v580
        %962 = vmatmul.mubr.bf16.gmra.mrb[0].mxu0 %v579
        %v963 = vpop.f32.mrb[0].mxu0
        %v964 = vadd.f32 0.0, %v963
        %v965 = vpop.f32.mrb[0].mxu0
        %v966 = vpop.f32.mrb[0].mxu0
        %v967 = vadd.f32 0.0, %v966
        %v968 = vpop.f32.mrb[0].mxu0
        %969 = vmatprep.mubr.bf16.mxu0 %v582
        %970 = vmatmul.mubr.bf16.gmra.mrb[0].mxu0 %v581
        %v971 = vpop.f32.mrb[0].mxu0
        %v972 = vadd.f32 0.0, %v971
        %v973 = vpop.f32.mrb[0].mxu0
        %v974 = vpop.f32.mrb[0].mxu0
        %v975 = vadd.f32 0.0, %v974
        %v976 = vpop.f32.mrb[0].mxu0
        %977 = vmatprep.mubr.bf16.mxu0 %v584
        %978 = vmatmul.mubr.bf16.gmra.mrb[0].mxu0 %v583
        %v979 = vpop.f32.mrb[0].mxu0
        %v980 = vadd.f32 0.0, %v979
        %v981 = vpop.f32.mrb[0].mxu0
        %v982 = vpop.f32.mrb[0].mxu0
        %v983 = vadd.f32 0.0, %v982
        %v984 = vpop.f32.mrb[0].mxu0
        %985 = vmatprep.mubr.bf16.mxu0 %v586
        %986 = vmatmul.mubr.bf16.gmra.mrb[0].mxu0 %v585
        %v987 = vpop.f32.mrb[0].mxu0
        %v988 = vadd.f32 0.0, %v987
        %v989 = vpop.f32.mrb[0].mxu0
        %v990 = vpop.f32.mrb[0].mxu0
        %v991 = vadd.f32 0.0, %v990
        %v992 = vpop.f32.mrb[0].mxu0
        %993 = vmatprep.mubr.bf16.mxu0 %v588
        %994 = vmatmul.mubr.bf16.gmra.mrb[0].mxu0 %v587
        %v995 = vpop.f32.mrb[0].mxu0
        %v996 = vadd.f32 0.0, %v995
        %v997 = vpop.f32.mrb[0].mxu0
        %v998 = vpop.f32.mrb[0].mxu0
        %v999 = vadd.f32 0.0, %v998
        %v1000 = vpop.f32.mrb[0].mxu0
        %1001 = vmatprep.mubr.bf16.mxu0 %v590
        %1002 = vmatmul.mubr.bf16.gmra.mrb[0].mxu0 %v589
        %v1003 = vpop.f32.mrb[0].mxu0
        %v1004 = vadd.f32 0.0, %v1003
        %v1005 = vpop.f32.mrb[0].mxu0
        %v1006 = vpop.f32.mrb[0].mxu0
        %v1007 = vadd.f32 0.0, %v1006
        %v1008 = vpop.f32.mrb[0].mxu0
        %1009 = vmatprep.mubr.bf16.mxu0 %v592
        %1010 = vmatmul.mubr.bf16.gmra.mrb[0].mxu0 %v591
        %v1011 = vpop.f32.mrb[0].mxu0
        %v1012 = vadd.f32 0.0, %v1011
        %v1013 = vpop.f32.mrb[0].mxu0
        %v1014 = vpop.f32.mrb[0].mxu0
        %v1015 = vadd.f32 0.0, %v1014
        %v1016 = vpop.f32.mrb[0].mxu0
        %1017 = vmatprep.mubr.bf16.mxu0 %v594
        %1018 = vmatmul.mubr.bf16.gmra.mrb[0].mxu0 %v593
        %v1019 = vpop.f32.mrb[0].mxu0
        %v1020 = vadd.f32 0.0, %v1019
        %v1021 = vpop.f32.mrb[0].mxu0
        %v1022 = vpop.f32.mrb[0].mxu0
        %v1023 = vadd.f32 0.0, %v1022
        %v1024 = vpop.f32.mrb[0].mxu0
        %1025 = vmatprep.mubr.bf16.mxu0 %v596
        %1026 = vmatmul.mubr.bf16.gmra.mrb[0].mxu0 %v595
        %v1027 = vpop.f32.mrb[0].mxu0
        %v1028 = vadd.f32 0.0, %v1027
        %v1029 = vpop.f32.mrb[0].mxu0
        %v1030 = vpop.f32.mrb[0].mxu0
        %v1031 = vadd.f32 0.0, %v1030
        %v1032 = vpop.f32.mrb[0].mxu0
        %1033 = vmatprep.mubr.bf16.mxu0 %v598
        %1034 = vmatmul.mubr.bf16.gmra.mrb[0].mxu0 %v597
        %v1035 = vpop.f32.mrb[0].mxu0
        %v1036 = vadd.f32 0.0, %v1035
        %v1037 = vpop.f32.mrb[0].mxu0
        %v1038 = vpop.f32.mrb[0].mxu0
        %v1039 = vadd.f32 0.0, %v1038
        %v1040 = vpop.f32.mrb[0].mxu0
        %1041 = vmatprep.mubr.bf16.mxu0 %v600
        %1042 = vmatmul.mubr.bf16.gmra.mrb[0].mxu0 %v599
        %v1043 = vpop.f32.mrb[0].mxu0
        %v1044 = vadd.f32 0.0, %v1043
        %v1045 = vpop.f32.mrb[0].mxu0
        %v1046 = vpop.f32.mrb[0].mxu0
        %v1047 = vadd.f32 0.0, %v1046
        %v1048 = vpop.f32.mrb[0].mxu0
        %1049 = vdwg.mxu0
        %v1050 = vadd.f32 %v796, %v860
        %v1051 = vadd.f32 %v1050, %v924
        %v1052 = vadd.f32 %v1051, %v988
        %v1053 = vadd.f32 %v799, %v863
        %v1054 = vadd.f32 %v1053, %v927
        %v1055 = vadd.f32 %v1054, %v991
        %v1056 = vadd.f32 %v804, %v868
        %v1057 = vadd.f32 %v1056, %v932
        %v1058 = vadd.f32 %v1057, %v996
        %v1059 = vadd.f32 %v807, %v871
        %v1060 = vadd.f32 %v1059, %v935
        %v1061 = vadd.f32 %v1060, %v999
        %v1062 = vadd.f32 %v812, %v876
        %v1063 = vadd.f32 %v1062, %v940
        %v1064 = vadd.f32 %v1063, %v1004
        %v1065 = vadd.f32 %v815, %v879
        %v1066 = vadd.f32 %v1065, %v943
        %v1067 = vadd.f32 %v1066, %v1007
        %v1068 = vadd.f32 %v820, %v884
        %v1069 = vadd.f32 %v1068, %v948
        %v1070 = vadd.f32 %v1069, %v1012
        %v1071 = vadd.f32 %v823, %v887
        %v1072 = vadd.f32 %v1071, %v951
        %v1073 = vadd.f32 %v1072, %v1015
        %v1074 = vadd.f32 %v828, %v892
        %v1075 = vadd.f32 %v1074, %v956
        %v1076 = vadd.f32 %v1075, %v1020
        %v1077 = vadd.f32 %v831, %v895
        %v1078 = vadd.f32 %v1077, %v959
        %v1079 = vadd.f32 %v1078, %v1023
        %v1080 = vadd.f32 %v836, %v900
        %v1081 = vadd.f32 %v1080, %v964
        %v1082 = vadd.f32 %v1081, %v1028
        %v1083 = vadd.f32 %v839, %v903
        %v1084 = vadd.f32 %v1083, %v967
        %v1085 = vadd.f32 %v1084, %v1031
        %v1086 = vadd.f32 %v844, %v908
        %v1087 = vadd.f32 %v1086, %v972
        %v1088 = vadd.f32 %v1087, %v1036
        %v1089 = vadd.f32 %v847, %v911
        %v1090 = vadd.f32 %v1089, %v975
        %v1091 = vadd.f32 %v1090, %v1039
        %v1092 = vadd.f32 %v852, %v916
        %v1093 = vadd.f32 %v1092, %v980
        %v1094 = vadd.f32 %v1093, %v1044
        %v1095 = vadd.f32 %v855, %v919
        %v1096 = vadd.f32 %v1095, %v983
        %v1097 = vadd.f32 %v1096, %v1047
        %v1098 = vpack.c.bf16 %v1055, %v1052
        %v1099 = vpack.c.bf16 %v1061, %v1058
        %v1100 = vpack.c.bf16 %v1067, %v1064
        %v1101 = vpack.c.bf16 %v1073, %v1070
        %v1102 = vpack.c.bf16 %v1079, %v1076
        %v1103 = vpack.c.bf16 %v1085, %v1082
        %v1104 = vpack.c.bf16 %v1091, %v1088
        %v1105 = vpack.c.bf16 %v1097, %v1094
        %v1106 = vld [vmem:[#allocation7] sm:$0xf]
        %v1107 = vld [vmem:[#allocation7 + $0x4] sm:$0xf]
        %v1108 = vld [vmem:[#allocation7 + $0x8] sm:$0xf]
        %v1109 = vld [vmem:[#allocation7 + $0xc] sm:$0xf]
        %v1110 = vld [vmem:[#allocation7 + $0x10] sm:$0xf]
        %v1111 = vld [vmem:[#allocation7 + $0x14] sm:$0xf]
        %v1112 = vld [vmem:[#allocation7 + $0x18] sm:$0xf]
        %v1113 = vld [vmem:[#allocation7 + $0x1c] sm:$0xf]
        %v1114 = vld [vmem:[#allocation7 + $0x20] sm:$0xf]
        %v1115 = vld [vmem:[#allocation7 + $0x24] sm:$0xf]
        %v1116 = vld [vmem:[#allocation7 + $0x28] sm:$0xf]
        %v1117 = vld [vmem:[#allocation7 + $0x2c] sm:$0xf]
        %v1118 = vld [vmem:[#allocation7 + $0x30] sm:$0xf]
        %v1119 = vld [vmem:[#allocation7 + $0x34] sm:$0xf]
        %v1120 = vld [vmem:[#allocation7 + $0x38] sm:$0xf]
        %v1121 = vld [vmem:[#allocation7 + $0x3c] sm:$0xf]
        %v1122 = vld [vmem:[%s3] sm:$0x1]
        %v1124 = vlaneseq
        %v1125 = vshrl.u32 %v1124, 7
        %v1126 = vsub.s32 0, %v1125
        %v1127 = vrot.slane %v1122, %v1126
        %v1145 = vunpack.c.l.b16 %v1106
        %v1146 = vunpack.c.l.b16 %v1107
        %v1147 = vunpack.c.l.b16 %v1108
        %v1148 = vunpack.c.l.b16 %v1109
        %v1149 = vunpack.c.l.b16 %v1110
        %v1150 = vunpack.c.l.b16 %v1111
        %v1151 = vunpack.c.l.b16 %v1112
        %v1152 = vunpack.c.l.b16 %v1113
        %v1153 = vunpack.c.l.b16 %v1114
        %v1154 = vunpack.c.l.b16 %v1115
        %v1155 = vunpack.c.l.b16 %v1116
        %v1156 = vunpack.c.l.b16 %v1117
        %v1157 = vunpack.c.l.b16 %v1118
        %v1158 = vunpack.c.l.b16 %v1119
        %v1159 = vunpack.c.l.b16 %v1120
        %v1160 = vunpack.c.l.b16 %v1121
        %v1161 = vpack.c.b16 %v1146, %v1145
        %v1162 = vpack.c.b16 %v1148, %v1147
        %v1163 = vpack.c.b16 %v1150, %v1149
        %v1164 = vpack.c.b16 %v1152, %v1151
        %v1165 = vpack.c.b16 %v1154, %v1153
        %v1166 = vpack.c.b16 %v1156, %v1155
        %v1167 = vpack.c.b16 %v1158, %v1157
        %v1168 = vpack.c.b16 %v1160, %v1159
        %1177 = vmatprep.subr.bf16.mxu0 0
        %1178 = vmatpush1.bf16.msra.mxu0 %v1161
        %1179 = vmatprep.subr.bf16.mxu0 0
        %1180 = vmatpush1.bf16.msra.mxu0 %v1162
        %1181 = vmatprep.subr.bf16.mxu0 0
        %1182 = vmatpush1.bf16.msra.mxu0 %v1163
        %1183 = vmatprep.subr.bf16.mxu0 0
        %1184 = vmatpush1.bf16.msra.mxu0 %v1164
        %1185 = vmatprep.subr.bf16.mxu0 0
        %1186 = vmatpush1.bf16.msra.mxu0 %v1165
        %1187 = vmatprep.subr.bf16.mxu0 0
        %1188 = vmatpush1.bf16.msra.mxu0 %v1166
        %1189 = vmatprep.subr.bf16.mxu0 0
        %1190 = vmatpush1.bf16.msra.mxu0 %v1167
        %1191 = vmatprep.subr.bf16.mxu0 0
        %1192 = vmatpush1.bf16.msra.mxu0 %v1168
        %1193 = vmatprep.subr.bf16.mxu0 0
        %1194 = vmatpush1.bf16.msra.mxu0 0
        %1195 = vmatprep.subr.bf16.mxu0 0
        %1196 = vmatpush1.bf16.msra.mxu0 0
        %1197 = vmatprep.subr.bf16.mxu0 0
        %1198 = vmatpush1.bf16.msra.mxu0 0
        %1199 = vmatprep.subr.bf16.mxu0 0
        %1200 = vmatpush1.bf16.msra.mxu0 0
        %1201 = vmatprep.subr.bf16.mxu0 0
        %1202 = vmatpush1.bf16.msra.mxu0 0
        %1203 = vmatprep.subr.bf16.mxu0 0
        %1204 = vmatpush1.bf16.msra.mxu0 0
        %1205 = vmatprep.subr.bf16.mxu0 0
        %1206 = vmatpush1.bf16.msra.mxu0 0
        %1207 = vmatprep.subr.bf16.mxu0 0
        %1208 = vmatpush1.bf16.msra.mxu0 0
        %1209 = vmatprep.mubr.bf16.mxu0 0
        %1210 = vmatmul.mubr.bf16.gmra.mrb[0].mxu0 %v1098
        %v1211 = vpop.f32.mrb[0].mxu0
        %v1212 = vadd.f32 %v1127, %v1211
        %v1213 = vpop.f32.mrb[0].mxu0
        %v1214 = vpop.f32.mrb[0].mxu0
        %v1215 = vadd.f32 %v1127, %v1214
        %v1216 = vpop.f32.mrb[0].mxu0
        %1217 = vmatprep.mubr.bf16.mxu0 0
        %1218 = vmatmul.mubr.bf16.gmra.mrb[0].mxu0 %v1099
        %v1219 = vpop.f32.mrb[0].mxu0
        %v1220 = vadd.f32 %v1127, %v1219
        %v1221 = vpop.f32.mrb[0].mxu0
        %v1222 = vpop.f32.mrb[0].mxu0
        %v1223 = vadd.f32 %v1127, %v1222
        %v1224 = vpop.f32.mrb[0].mxu0
        %1225 = vmatprep.mubr.bf16.mxu0 0
        %1226 = vmatmul.mubr.bf16.gmra.mrb[0].mxu0 %v1100
        %v1227 = vpop.f32.mrb[0].mxu0
        %v1228 = vadd.f32 %v1127, %v1227
        %v1229 = vpop.f32.mrb[0].mxu0
        %v1230 = vpop.f32.mrb[0].mxu0
        %v1231 = vadd.f32 %v1127, %v1230
        %v1232 = vpop.f32.mrb[0].mxu0
        %1233 = vmatprep.mubr.bf16.mxu0 0
        %1234 = vmatmul.mubr.bf16.gmra.mrb[0].mxu0 %v1101
        %v1235 = vpop.f32.mrb[0].mxu0
        %v1236 = vadd.f32 %v1127, %v1235
        %v1237 = vpop.f32.mrb[0].mxu0
        %v1238 = vpop.f32.mrb[0].mxu0
        %v1239 = vadd.f32 %v1127, %v1238
        %v1240 = vpop.f32.mrb[0].mxu0
        %1241 = vmatprep.mubr.bf16.mxu0 0
        %1242 = vmatmul.mubr.bf16.gmra.mrb[0].mxu0 %v1102
        %v1243 = vpop.f32.mrb[0].mxu0
        %v1244 = vadd.f32 %v1127, %v1243
        %v1245 = vpop.f32.mrb[0].mxu0
        %v1246 = vpop.f32.mrb[0].mxu0
        %v1247 = vadd.f32 %v1127, %v1246
        %v1248 = vpop.f32.mrb[0].mxu0
        %1249 = vmatprep.mubr.bf16.mxu0 0
        %1250 = vmatmul.mubr.bf16.gmra.mrb[0].mxu0 %v1103
        %v1251 = vpop.f32.mrb[0].mxu0
        %v1252 = vadd.f32 %v1127, %v1251
        %v1253 = vpop.f32.mrb[0].mxu0
        %v1254 = vpop.f32.mrb[0].mxu0
        %v1255 = vadd.f32 %v1127, %v1254
        %v1256 = vpop.f32.mrb[0].mxu0
        %1257 = vmatprep.mubr.bf16.mxu0 0
        %1258 = vmatmul.mubr.bf16.gmra.mrb[0].mxu0 %v1104
        %v1259 = vpop.f32.mrb[0].mxu0
        %v1260 = vadd.f32 %v1127, %v1259
        %v1261 = vpop.f32.mrb[0].mxu0
        %v1262 = vpop.f32.mrb[0].mxu0
        %v1263 = vadd.f32 %v1127, %v1262
        %v1264 = vpop.f32.mrb[0].mxu0
        %1265 = vmatprep.mubr.bf16.mxu0 0
        %1266 = vmatmul.mubr.bf16.gmra.mrb[0].mxu0 %v1105
        %v1267 = vpop.f32.mrb[0].mxu0
        %v1268 = vadd.f32 %v1127, %v1267
        %v1269 = vpop.f32.mrb[0].mxu0
        %v1270 = vpop.f32.mrb[0].mxu0
        %v1271 = vadd.f32 %v1127, %v1270
        %v1272 = vpop.f32.mrb[0].mxu0
        %1273 = vdwg.mxu0
        %v1274 = vmul.f32 %v1212, %v1212
        %v1275 = vmul.f32 %v1215, %v1215
        %v1276 = vmul.f32 %v1220, %v1220
        %v1277 = vmul.f32 %v1223, %v1223
        %v1278 = vmul.f32 %v1228, %v1228
        %v1279 = vmul.f32 %v1231, %v1231
        %v1280 = vmul.f32 %v1236, %v1236
        %v1281 = vmul.f32 %v1239, %v1239
        %v1282 = vmul.f32 %v1244, %v1244
        %v1283 = vmul.f32 %v1247, %v1247
        %v1284 = vmul.f32 %v1252, %v1252
        %v1285 = vmul.f32 %v1255, %v1255
        %v1286 = vmul.f32 %v1260, %v1260
        %v1287 = vmul.f32 %v1263, %v1263
        %v1288 = vmul.f32 %v1268, %v1268
        %v1289 = vmul.f32 %v1271, %v1271
        %1290 = vadd.xlane.f32.xlu0 %v1274
        %v1291 = vpop.xlane.xlu0 %1290
        %1292 = vadd.xlane.f32.xlu0 %v1275
        %v1293 = vpop.xlane.xlu0 %1292
        %1294 = vadd.xlane.f32.xlu0 %v1276
        %v1295 = vpop.xlane.xlu0 %1294
        %1296 = vadd.xlane.f32.xlu0 %v1277
        %v1297 = vpop.xlane.xlu0 %1296
        %1298 = vadd.xlane.f32.xlu0 %v1278
        %v1299 = vpop.xlane.xlu0 %1298
        %1300 = vadd.xlane.f32.xlu0 %v1279
        %v1301 = vpop.xlane.xlu0 %1300
        %1302 = vadd.xlane.f32.xlu0 %v1280
        %v1303 = vpop.xlane.xlu0 %1302
        %1304 = vadd.xlane.f32.xlu0 %v1281
        %v1305 = vpop.xlane.xlu0 %1304
        %1306 = vadd.xlane.f32.xlu0 %v1282
        %v1307 = vpop.xlane.xlu0 %1306
        %1308 = vadd.xlane.f32.xlu0 %v1283
        %v1309 = vpop.xlane.xlu0 %1308
        %1310 = vadd.xlane.f32.xlu0 %v1284
        %v1311 = vpop.xlane.xlu0 %1310
        %1312 = vadd.xlane.f32.xlu0 %v1285
        %v1313 = vpop.xlane.xlu0 %1312
        %1314 = vadd.xlane.f32.xlu0 %v1286
        %v1315 = vpop.xlane.xlu0 %1314
        %1316 = vadd.xlane.f32.xlu0 %v1287
        %v1317 = vpop.xlane.xlu0 %1316
        %1318 = vadd.xlane.f32.xlu0 %v1288
        %v1319 = vpop.xlane.xlu0 %1318
        %1320 = vadd.xlane.f32.xlu0 %v1289
        %v1321 = vpop.xlane.xlu0 %1320
        %v1322 = vmax.f32 %v1291, 1e-24
        %v1323 = vmax.f32 %v1293, 1e-24
        %v1324 = vmax.f32 %v1295, 1e-24
        %v1325 = vmax.f32 %v1297, 1e-24
        %v1326 = vmax.f32 %v1299, 1e-24
        %v1327 = vmax.f32 %v1301, 1e-24
        %v1328 = vmax.f32 %v1303, 1e-24
        %v1329 = vmax.f32 %v1305, 1e-24
        %v1330 = vmax.f32 %v1307, 1e-24
        %v1331 = vmax.f32 %v1309, 1e-24
        %v1332 = vmax.f32 %v1311, 1e-24
        %v1333 = vmax.f32 %v1313, 1e-24
        %v1334 = vmax.f32 %v1315, 1e-24
        %v1335 = vmax.f32 %v1317, 1e-24
        %v1336 = vmax.f32 %v1319, 1e-24
        %v1337 = vmax.f32 %v1321, 1e-24
        %v1338 = vrsqrt.pop %v1322
        %v1339 = vrsqrt.pop %v1323
        %v1340 = vrsqrt.pop %v1324
        %v1341 = vrsqrt.pop %v1325
        %v1342 = vrsqrt.pop %v1326
        %v1343 = vrsqrt.pop %v1327
        %v1344 = vrsqrt.pop %v1328
        %v1345 = vrsqrt.pop %v1329
        %v1346 = vrsqrt.pop %v1330
        %v1347 = vrsqrt.pop %v1331
        %v1348 = vrsqrt.pop %v1332
        %v1349 = vrsqrt.pop %v1333
        %v1350 = vrsqrt.pop %v1334
        %v1351 = vrsqrt.pop %v1335
        %v1352 = vrsqrt.pop %v1336
        %v1353 = vrsqrt.pop %v1337
        %v1354 = vmul.f32 %v1212, %v1338
        %v1355 = vmul.f32 %v1215, %v1339
        %v1356 = vmul.f32 %v1220, %v1340
        %v1357 = vmul.f32 %v1223, %v1341
        %v1358 = vmul.f32 %v1228, %v1342
        %v1359 = vmul.f32 %v1231, %v1343
        %v1360 = vmul.f32 %v1236, %v1344
        %v1361 = vmul.f32 %v1239, %v1345
        %v1362 = vmul.f32 %v1244, %v1346
        %v1363 = vmul.f32 %v1247, %v1347
        %v1364 = vmul.f32 %v1252, %v1348
        %v1365 = vmul.f32 %v1255, %v1349
        %v1366 = vmul.f32 %v1260, %v1350
        %v1367 = vmul.f32 %v1263, %v1351
        %v1368 = vmul.f32 %v1268, %v1352
        %v1369 = vmul.f32 %v1271, %v1353
        %1370 = vst [vmem:[%s245] sm:$0xff] %v1354
        %1371 = vst [vmem:[%s245 + $0x8] sm:$0xff] %v1355
        %1372 = vst [vmem:[%s245 + $0x10] sm:$0xff] %v1356
        %1373 = vst [vmem:[%s245 + $0x18] sm:$0xff] %v1357
        %1374 = vst [vmem:[%s245 + $0x20] sm:$0xff] %v1358
        %1375 = vst [vmem:[%s245 + $0x28] sm:$0xff] %v1359
        %1376 = vst [vmem:[%s245 + $0x30] sm:$0xff] %v1360
        %1377 = vst [vmem:[%s245 + $0x38] sm:$0xff] %v1361
        %1378 = vst [vmem:[%s245 + $0x40] sm:$0xff] %v1362
        %1379 = vst [vmem:[%s245 + $0x48] sm:$0xff] %v1363
        %1380 = vst [vmem:[%s245 + $0x50] sm:$0xff] %v1364
        %1381 = vst [vmem:[%s245 + $0x58] sm:$0xff] %v1365
        %1382 = vst [vmem:[%s245 + $0x60] sm:$0xff] %v1366
        %1383 = vst [vmem:[%s245 + $0x68] sm:$0xff] %v1367
        %1384 = vst [vmem:[%s245 + $0x70] sm:$0xff] %v1368
        %1385 = vst [vmem:[%s245 + $0x78] sm:$0xff] %v1369
        %s1386 = sand.u32 %s119, 1
        %s1387 = scalar_lea.sflag [#allocation4], %s1386
        %s1388 = sand.u32 %s119, 1
        %s1389 = smul.addr %s1388, 128
        %s1390 = scalar_lea.vmem [#allocation8], %s1389
        // Predicated region
        $region49: #{tpu_custom_call.1} parent=35 // pred_check
          %p1391 = pneg %p129
        $region50: #{tpu_custom_call.1} parent=35 // pred_check_branch
          %1393 = sbr.rel (%p1391) target = $region52
        $region51: #{tpu_custom_call.1} parent=35 // pred_region
          %s1394 = smul.u32 16, %s22
          %s1396 = ssub.s32 2048, 2048
          %1397 = vsyncadd %s1387, %s1396
          %s1398 = smul.addr %s1394, 128
          %s1399 = scalar_lea.hbm %s4, %s1398
          %s1400 = sshll.u32 %s1390, 4
          %s1401 = int_to_ptr.vmem [resolvable:$true] %s1400
          %1406 = dma.vmem_to_hbm [thread:$0]  %s1401, 2048, %s1399, %s1387, 128, 128, 8
        $region52: #{tpu_custom_call.1} parent=35 // pred_fallthru
          _
      $region36: #{tpu_custom_call.1} parent=5 // pred_fallthru
        _
      %p1407 = scmp.le.s32.totalorder 2, %s17
      // Predicated region
      $region53: #{tpu_custom_call.1} parent=5 // pred_check
        %p1408 = pneg %p1407
      $region54: #{tpu_custom_call.1} parent=5 // pred_check_branch
        %1410 = sbr.rel (%p1408) target = $region56
      $region55: #{tpu_custom_call.1} parent=5 // pred_region
        %s1411 = ssub.s32 %s17, 2
        // Predicated region
        $region57: #{tpu_custom_call.1} parent=55 // pred_check
          %p1412 = pneg %p135
        $region58: #{tpu_custom_call.1} parent=55 // pred_check_branch
          %1414 = sbr.rel (%p1412) target = $region60
        $region59: #{tpu_custom_call.1} parent=55 // pred_region
          %s1415 = sand.u32 %s120, 1
          %s1416 = scalar_lea.sflag [#allocation4], %s1415
          %s1417 = sand.u32 %s120, 1
          %s1418 = smul.addr %s1417, 128
          %s1419 = scalar_lea.vmem [#allocation8], %s1418
          %1420 = dma.done %s1416, 2048
        $region60: #{tpu_custom_call.1} parent=55 // pred_fallthru
          _
      $region56: #{tpu_custom_call.1} parent=5 // pred_fallthru
        _
    $region6: #{tpu_custom_call.1} parent=1 // loop_footer
      %s21 = sadd.s32 1, %s17
    $region7: #{tpu_custom_call.1} parent=1 // loop_footer_branch
      %16 = sbr.rel target = $region3
    $region8: #{tpu_custom_call.1} parent=1 // loop_exit
      _
    %1421 = vsyncpa [#allocation3], 1
    %s1422 = scalar_lea.sflag [#allocation3], 1
    %1423 = vsyncpa %s1422, 1
    %1424 = vsyncpa [#allocation6], 1
    %1425 = vsyncpa [#allocation4], 1
    %s1426 = scalar_lea.sflag [#allocation4], 1
    %1427 = vsyncpa %s1426, 1

// kernel: tpu_custom_call.1
$region0: #{tpu_custom_call.1}
  #allocation0 [shape = 'u32[]', space=smem, size = 0x4, offset = 0x4, fixed_abs, tag = 'smem constant byte address 0x4 - core index']
  #allocation1 [shape = 'u32[144,128]{1,0:T(1,128)}', space=vmem, size = 0x12000, scoped, tag = 'internal scratch']
  %s0 = inlined_call_operand.hbm [shape: bf16[2048,256], index: 0, kind: input, shape index: {}]
  %s1 = inlined_call_operand.hbm [shape: bf16[256,128], index: 1, kind: input, shape index: {}]
  %s2 = inlined_call_operand.hbm [shape: bf16[128,128], index: 2, kind: input, shape index: {}]
  %s3 = inlined_call_operand.vmem [shape: f32[1,128], index: 3, kind: input, shape index: {}]
  %s4 = inlined_call_operand.hbm [shape: f32[512,128], index: 4, kind: output, shape index: {}]
  %s5 = sld [smem:[#allocation0]]
  $region61: #{tpu_custom_call.1} parent=0
    _
  %s7 = ssub.s32 1, %s5
  %s8 = scalar_select 0, %s7, %s5
  $region1: #{tpu_custom_call.1} parent=0
    #allocation2 [shape = 'u8[524288]{0}', space=vmem, size = 0x80000, scoped, tag = 'input window, operand 0']
    #allocation3 [shape = 's32[2]{0}', space=sflag, size = 0x8, scoped, tag = 'scoped memory for tpu_custom_call.1']
    #allocation4 [shape = 's32[2]{0}', space=sflag, size = 0x8, scoped, tag = 'scoped memory for tpu_custom_call.1']
    #allocation5 [shape = 'u8[65536]{0}', space=vmem, size = 0x10000, scoped, tag = 'input window, operand 1, single buffered']
    #allocation6 [shape = 's32[1]{0}', space=sflag, size = 0x4, scoped, tag = 'scoped memory for tpu_custom_call.1']
    #allocation7 [shape = 'u8[32768]{0}', space=vmem, size = 0x8000, scoped, tag = 'input window, operand 2, single buffered']
    #allocation8 [shape = 'u8[131072]{0}', space=vmem, size = 0x20000, scoped, tag = 'output window, operand 0']
    %9 = vsyncpa [#allocation3], 0
    %s10 = scalar_lea.sflag [#allocation3], 1
    %11 = vsyncpa %s10, 0
    %12 = vsyncpa [#allocation6], 0
    %13 = vsyncpa [#allocation4], 0
    %s14 = scalar_lea.sflag [#allocation4], 1
    %15 = vsyncpa %s14, 0
    loop: start=0, step=1, limit=6
    $region2: #{tpu_custom_call.1} parent=1 // loop_pre_header
      _
    $region3: #{tpu_custom_call.1} parent=1 // loop_header
      %s17 = sphi 0, %s21
      %p18 = scmp.ge.s32.totalorder %s17, 6
      %s27 = sphi 0, %s29
      %s30 = sphi 0, %s27
      %s31 = sphi 0, %s30
      %s47 = sphi 0, %s31
      %s51 = sphi 0, %s51
      %s53 = sphi 0, %s51
      %s54 = sphi 0, %s53
      %s68 = sphi 0, %s54
      %s72 = sphi 0, %s72
      %s74 = sphi 0, %s72
      %s75 = sphi 0, %s74
      %s89 = sphi 0, %s75
      %s93 = sphi 0, %s93
      %s95 = sphi 0, %s93
      %s96 = sphi 0, %s95
      %s110 = sphi 0, %s96
      %s116 = sphi 0, %s118
      %s119 = sphi 0, %s116
      %s120 = sphi 0, %s119
      %s136 = sphi 0, %s120
    $region4: #{tpu_custom_call.1} parent=1 // loop_header_branch
      %20 = sbr.rel (%p18) target = $region8
    $region5: #{tpu_custom_call.1} parent=1 // loop_body
      %s22 = ssub.s32 %s17, 1
      %s23 = ssub.s32 %s17, 2
      %s24 = sadd.s32 %s17, 1
      %s25 = ssub.s32 %s17, %s24
      %p26 = scmp.eq.s32.totalorder %s25, 0
      %s28 = sadd.s32 %s27, 1
      %s29 = scalar_select %p26, %s27, %s28
      %p32 = pneg %p26
      %p33 = scmp.eq.s32.totalorder %s17, 3
      %p34 = por %p32, %p33
      %p35 = scmp.ne.s32.totalorder %s27, %s30
      %p36 = scmp.eq.s32.totalorder %s17, 0
      %p37 = por %p35, %p36
      %p38 = scmp.ne.s32.totalorder %s27, %s30
      %p39 = scmp.eq.s32.totalorder %s22, 3
      %p40 = por %p38, %p39
      %p41 = scmp.ne.s32.totalorder %s30, %s31
      %p42 = scmp.eq.s32.totalorder %s22, 0
      %p43 = por %p41, %p42
      %p44 = scmp.ne.s32.totalorder %s30, %s31
      %p45 = scmp.eq.s32.totalorder %s23, 3
      %p46 = por %p44, %p45
      %p48 = scmp.ne.s32.totalorder %s31, %s47
      %p49 = scmp.eq.s32.totalorder %s23, 0
      %p50 = por %p48, %p49
      %s52 = sadd.s32 %s51, 1
      %p55 = scmp.eq.s32.totalorder %s17, 3
      %p56 = scmp.ne.s32.totalorder %s51, %s53
      %p57 = scmp.eq.s32.totalorder %s17, 0
      %p58 = por %p56, %p57
      %p59 = scmp.ne.s32.totalorder %s51, %s53
      %p60 = scmp.eq.s32.totalorder %s22, 3
      %p61 = por %p59, %p60
      %p62 = scmp.ne.s32.totalorder %s53, %s54
      %p63 = scmp.eq.s32.totalorder %s22, 0
      %p64 = por %p62, %p63
      %p65 = scmp.ne.s32.totalorder %s53, %s54
      %p66 = scmp.eq.s32.totalorder %s23, 3
      %p67 = por %p65, %p66
      %p69 = scmp.ne.s32.totalorder %s54, %s68
      %p70 = scmp.eq.s32.totalorder %s23, 0
      %p71 = por %p69, %p70
      %s73 = sadd.s32 %s72, 1
      %p76 = scmp.eq.s32.totalorder %s17, 3
      %p77 = scmp.ne.s32.totalorder %s72, %s74
      %p78 = scmp.eq.s32.totalorder %s17, 0
      %p79 = por %p77, %p78
      %p80 = scmp.ne.s32.totalorder %s72, %s74
      %p81 = scmp.eq.s32.totalorder %s22, 3
      %p82 = por %p80, %p81
      %p83 = scmp.ne.s32.totalorder %s74, %s75
      %p84 = scmp.eq.s32.totalorder %s22, 0
      %p85 = por %p83, %p84
      %p86 = scmp.ne.s32.totalorder %s74, %s75
      %p87 = scmp.eq.s32.totalorder %s23, 3
      %p88 = por %p86, %p87
      %p90 = scmp.ne.s32.totalorder %s75, %s89
      %p91 = scmp.eq.s32.totalorder %s23, 0
      %p92 = por %p90, %p91
      %s94 = sadd.s32 %s93, 1
      %p97 = scmp.eq.s32.totalorder %s17, 3
      %p98 = scmp.ne.s32.totalorder %s93, %s95
      %p99 = scmp.eq.s32.totalorder %s17, 0
      %p100 = por %p98, %p99
      %p101 = scmp.ne.s32.totalorder %s93, %s95
      %p102 = scmp.eq.s32.totalorder %s22, 3
      %p103 = por %p101, %p102
      %p104 = scmp.ne.s32.totalorder %s95, %s96
      %p105 = scmp.eq.s32.totalorder %s22, 0
      %p106 = por %p104, %p105
      %p107 = scmp.ne.s32.totalorder %s95, %s96
      %p108 = scmp.eq.s32.totalorder %s23, 3
      %p109 = por %p107, %p108
      %p111 = scmp.ne.s32.totalorder %s96, %s110
      %p112 = scmp.eq.s32.totalorder %s23, 0
      %p113 = por %p111, %p112
      %s114 = ssub.s32 %s17, %s24
      %p115 = scmp.eq.s32.totalorder %s114, 0
      %s117 = sadd.s32 %s116, 1
      %s118 = scalar_select %p115, %s116, %s117
      %p121 = pneg %p115
      %p122 = scmp.eq.s32.totalorder %s17, 3
      %p123 = por %p121, %p122
      %p124 = scmp.ne.s32.totalorder %s116, %s119
      %p125 = scmp.eq.s32.totalorder %s17, 0
      %p126 = por %p124, %p125
      %p127 = scmp.ne.s32.totalorder %s116, %s119
      %p128 = scmp.eq.s32.totalorder %s22, 3
      %p129 = por %p127, %p128
      %p130 = scmp.ne.s32.totalorder %s119, %s120
      %p131 = scmp.eq.s32.totalorder %s22, 0
      %p132 = por %p130, %p131
      %p133 = scmp.ne.s32.totalorder %s119, %s120
      %p134 = scmp.eq.s32.totalorder %s23, 3
      %p135 = por %p133, %p134
      %p137 = scmp.ne.s32.totalorder %s120, %s136
      %p138 = scmp.eq.s32.totalorder %s23, 0
      %p139 = por %p137, %p138
      %p140 = scmp.le.s32.totalorder 1, %s17
      %p141 = scmp.lt.s32.totalorder %s17, 5
      %p142 = pnand %p140, %p141
      %p143 = pneg %p142
      // Predicated region
      $region9: #{tpu_custom_call.1} parent=5 // pred_check
        _
      $region10: #{tpu_custom_call.1} parent=5 // pred_check_branch
        %145 = sbr.rel (%p142) target = $region12
      $region11: #{tpu_custom_call.1} parent=5 // pred_region
        %s146 = ssub.s32 %s17, 1
        // Predicated region
        $region13: #{tpu_custom_call.1} parent=11 // pred_check
          %p147 = pneg %p64
        $region14: #{tpu_custom_call.1} parent=11 // pred_check_branch
          %149 = sbr.rel (%p147) target = $region16
        $region15: #{tpu_custom_call.1} parent=11 // pred_region
          %s151 = ssub.s32 2048, 2048
          %152 = vsyncadd [#allocation6], %s151
          %s153 = sshll.u32 [#allocation5], 4
          %s154 = int_to_ptr.vmem [resolvable:$true] %s153
          %159 = dma.hbm_to_vmem [thread:$0]  %s1, 2048, %s154, [#allocation6], 64, 64, 4
        $region16: #{tpu_custom_call.1} parent=11 // pred_fallthru
          _
        // Predicated region
        $region17: #{tpu_custom_call.1} parent=11 // pred_check
          %p160 = pneg %p85
        $region18: #{tpu_custom_call.1} parent=11 // pred_check_branch
          %162 = sbr.rel (%p160) target = $region20
        $region19: #{tpu_custom_call.1} parent=11 // pred_region
          %s164 = ssub.s32 1024, 1024
          %165 = vsyncadd [#allocation6], %s164
          %s166 = sshll.u32 [#allocation7], 4
          %s167 = int_to_ptr.vmem [resolvable:$true] %s166
          %172 = dma.hbm_to_vmem [thread:$0]  %s2, 1024, %s167, [#allocation6], 64, 64, 4
        $region20: #{tpu_custom_call.1} parent=11 // pred_fallthru
          _
        // Predicated region
        $region21: #{tpu_custom_call.1} parent=11 // pred_check
          %p173 = pneg %p106
        $region22: #{tpu_custom_call.1} parent=11 // pred_check_branch
          %175 = sbr.rel (%p173) target = $region24
        $region23: #{tpu_custom_call.1} parent=11 // pred_region
          _
        $region24: #{tpu_custom_call.1} parent=11 // pred_fallthru
          _
      $region12: #{tpu_custom_call.1} parent=5 // pred_fallthru
        _
      %p176 = scmp.lt.s32.totalorder %s17, 4
      // Predicated region
      $region25: #{tpu_custom_call.1} parent=5 // pred_check
        %p177 = pneg %p176
      $region26: #{tpu_custom_call.1} parent=5 // pred_check_branch
        %179 = sbr.rel (%p177) target = $region28
      $region27: #{tpu_custom_call.1} parent=5 // pred_region
        // Predicated region
        $region29: #{tpu_custom_call.1} parent=27 // pred_check
          %p180 = pneg %p37
        $region30: #{tpu_custom_call.1} parent=27 // pred_check_branch
          %182 = sbr.rel (%p180) target = $region32
        $region31: #{tpu_custom_call.1} parent=27 // pred_region
          %s183 = sand.u32 %s27, 1
          %s184 = scalar_lea.sflag [#allocation3], %s183
          %s185 = sand.u32 %s27, 1
          %s186 = smul.addr %s185, 512
          %s187 = scalar_lea.vmem [#allocation2], %s186
          %s188 = smul.u32 64, %s17
          %s190 = ssub.s32 8192, 8192
          %191 = vsyncadd %s184, %s190
          %s192 = smul.addr %s188, 2
          %s193 = smul.addr %s192, 64
          %s194 = scalar_lea.hbm %s0, %s193
          %s195 = sshll.u32 %s187, 4
          %s196 = int_to_ptr.vmem [resolvable:$true] %s195
          %201 = dma.hbm_to_vmem [thread:$0]  %s194, 8192, %s196, %s184, 128, 128, 8
        $region32: #{tpu_custom_call.1} parent=27 // pred_fallthru
          _
      $region28: #{tpu_custom_call.1} parent=5 // pred_fallthru
        _
      %p202 = scmp.le.s32.totalorder 1, %s17
      %p203 = scmp.lt.s32.totalorder %s17, 5
      %p204 = pnand %p202, %p203
      %p205 = pneg %p204
      // Predicated region
      $region33: #{tpu_custom_call.1} parent=5 // pred_check
        _
      $region34: #{tpu_custom_call.1} parent=5 // pred_check_branch
        %207 = sbr.rel (%p204) target = $region36
      $region35: #{tpu_custom_call.1} parent=5 // pred_region
        %s208 = ssub.s32 %s17, 1
        %s209 = sand.u32 %s30, 1
        %s210 = scalar_lea.sflag [#allocation3], %s209
        %s211 = sand.u32 %s30, 1
        %s212 = smul.addr %s211, 512
        %s213 = scalar_lea.vmem [#allocation2], %s212
        // Predicated region
        $region37: #{tpu_custom_call.1} parent=35 // pred_check
          %p214 = pneg %p43
        $region38: #{tpu_custom_call.1} parent=35 // pred_check_branch
          %216 = sbr.rel (%p214) target = $region40
        $region39: #{tpu_custom_call.1} parent=35 // pred_region
          %217 = dma.done %s210, 8192
        $region40: #{tpu_custom_call.1} parent=35 // pred_fallthru
          _
        // Predicated region
        $region41: #{tpu_custom_call.1} parent=35 // pred_check
          %p218 = pneg %p64
        $region42: #{tpu_custom_call.1} parent=35 // pred_check_branch
          %220 = sbr.rel (%p218) target = $region44
        $region43: #{tpu_custom_call.1} parent=35 // pred_region
          %221 = dma.done [#allocation6], 2048
        $region44: #{tpu_custom_call.1} parent=35 // pred_fallthru
          _
        // Predicated region
        $region45: #{tpu_custom_call.1} parent=35 // pred_check
          %p222 = pneg %p85
        $region46: #{tpu_custom_call.1} parent=35 // pred_check_branch
          %224 = sbr.rel (%p222) target = $region48
        $region47: #{tpu_custom_call.1} parent=35 // pred_region
          %225 = dma.done [#allocation6], 1024
        $region48: #{tpu_custom_call.1} parent=35 // pred_fallthru
          _
        %s226 = sand.u32 %s30, 1
        %s227 = scalar_lea.sflag [#allocation3], %s226
        %s228 = sand.u32 %s30, 1
        %s229 = smul.addr %s228, 512
        %s230 = scalar_lea.vmem [#allocation2], %s229
        %p231 = pneg %p43
        %p232 = pneg %p40
        %p233 = pneg %p64
        %p234 = pneg %p61
        %p235 = pneg %p85
        %p236 = pneg %p82
        %p237 = pneg %p106
        %p238 = pneg %p103
        %p239 = pneg %p132
        %p240 = pneg %p129
        %s241 = sand.u32 %s119, 1
        %s242 = scalar_lea.sflag [#allocation4], %s241
        %s243 = sand.u32 %s119, 1
        %s244 = smul.addr %s243, 128
        %s245 = scalar_lea.vmem [#allocation8], %s244
        %s246 = smul.u32 64, %s22
        %s247 = smul.u32 16, %s22
        %v249 = vld [vmem:[%s213] sm:$0xff]
        %v250 = vld [vmem:[%s213 + $0x8] sm:$0xff]
        %v251 = vld [vmem:[%s213 + $0x10] sm:$0xff]
        %v252 = vld [vmem:[%s213 + $0x18] sm:$0xff]
        %v253 = vld [vmem:[%s213 + $0x20] sm:$0xff]
        %v254 = vld [vmem:[%s213 + $0x28] sm:$0xff]
        %v255 = vld [vmem:[%s213 + $0x30] sm:$0xff]
        %v256 = vld [vmem:[%s213 + $0x38] sm:$0xff]
        %v257 = vld [vmem:[%s213 + $0x40] sm:$0xff]
        %v258 = vld [vmem:[%s213 + $0x48] sm:$0xff]
        %v259 = vld [vmem:[%s213 + $0x50] sm:$0xff]
        %v260 = vld [vmem:[%s213 + $0x58] sm:$0xff]
        %v261 = vld [vmem:[%s213 + $0x60] sm:$0xff]
        %v262 = vld [vmem:[%s213 + $0x68] sm:$0xff]
        %v263 = vld [vmem:[%s213 + $0x70] sm:$0xff]
        %v264 = vld [vmem:[%s213 + $0x78] sm:$0xff]
        %v265 = vld [vmem:[%s213 + $0x80] sm:$0xff]
        %v266 = vld [vmem:[%s213 + $0x88] sm:$0xff]
        %v267 = vld [vmem:[%s213 + $0x90] sm:$0xff]
        %v268 = vld [vmem:[%s213 + $0x98] sm:$0xff]
        %v269 = vld [vmem:[%s213 + $0xa0] sm:$0xff]
        %v270 = vld [vmem:[%s213 + $0xa8] sm:$0xff]
        %v271 = vld [vmem:[%s213 + $0xb0] sm:$0xff]
        %v272 = vld [vmem:[%s213 + $0xb8] sm:$0xff]
        %v273 = vld [vmem:[%s213 + $0xc0] sm:$0xff]
        %v274 = vld [vmem:[%s213 + $0xc8] sm:$0xff]
        %v275 = vld [vmem:[%s213 + $0xd0] sm:$0xff]
        %v276 = vld [vmem:[%s213 + $0xd8] sm:$0xff]
        %v277 = vld [vmem:[%s213 + $0xe0] sm:$0xff]
        %v278 = vld [vmem:[%s213 + $0xe8] sm:$0xff]
        %v279 = vld [vmem:[%s213 + $0xf0] sm:$0xff]
        %v280 = vld [vmem:[%s213 + $0xf8] sm:$0xff]
        %v281 = vld [vmem:[%s213 + $0x100] sm:$0xff]
        %v282 = vld [vmem:[%s213 + $0x108] sm:$0xff]
        %v283 = vld [vmem:[%s213 + $0x110] sm:$0xff]
        %v284 = vld [vmem:[%s213 + $0x118] sm:$0xff]
        %v285 = vld [vmem:[%s213 + $0x120] sm:$0xff]
        %v286 = vld [vmem:[%s213 + $0x128] sm:$0xff]
        %v287 = vld [vmem:[%s213 + $0x130] sm:$0xff]
        %v288 = vld [vmem:[%s213 + $0x138] sm:$0xff]
        %v289 = vld [vmem:[%s213 + $0x140] sm:$0xff]
        %v290 = vld [vmem:[%s213 + $0x148] sm:$0xff]
        %v291 = vld [vmem:[%s213 + $0x150] sm:$0xff]
        %v292 = vld [vmem:[%s213 + $0x158] sm:$0xff]
        %v293 = vld [vmem:[%s213 + $0x160] sm:$0xff]
        %v294 = vld [vmem:[%s213 + $0x168] sm:$0xff]
        %v295 = vld [vmem:[%s213 + $0x170] sm:$0xff]
        %v296 = vld [vmem:[%s213 + $0x178] sm:$0xff]
        %v297 = vld [vmem:[%s213 + $0x180] sm:$0xff]
        %v298 = vld [vmem:[%s213 + $0x188] sm:$0xff]
        %v299 = vld [vmem:[%s213 + $0x190] sm:$0xff]
        %v300 = vld [vmem:[%s213 + $0x198] sm:$0xff]
        %v301 = vld [vmem:[%s213 + $0x1a0] sm:$0xff]
        %v302 = vld [vmem:[%s213 + $0x1a8] sm:$0xff]
        %v303 = vld [vmem:[%s213 + $0x1b0] sm:$0xff]
        %v304 = vld [vmem:[%s213 + $0x1b8] sm:$0xff]
        %v305 = vld [vmem:[%s213 + $0x1c0] sm:$0xff]
        %v306 = vld [vmem:[%s213 + $0x1c8] sm:$0xff]
        %v307 = vld [vmem:[%s213 + $0x1d0] sm:$0xff]
        %v308 = vld [vmem:[%s213 + $0x1d8] sm:$0xff]
        %v309 = vld [vmem:[%s213 + $0x1e0] sm:$0xff]
        %v310 = vld [vmem:[%s213 + $0x1e8] sm:$0xff]
        %v311 = vld [vmem:[%s213 + $0x1f0] sm:$0xff]
        %v312 = vld [vmem:[%s213 + $0x1f8] sm:$0xff]
        %v313 = vld [vmem:[#allocation5] sm:$0xf]
        %v314 = vld [vmem:[#allocation5 + $0x4] sm:$0xf]
        %v315 = vld [vmem:[#allocation5 + $0x8] sm:$0xf]
        %v316 = vld [vmem:[#allocation5 + $0xc] sm:$0xf]
        %v317 = vld [vmem:[#allocation5 + $0x10] sm:$0xf]
        %v318 = vld [vmem:[#allocation5 + $0x14] sm:$0xf]
        %v319 = vld [vmem:[#allocation5 + $0x18] sm:$0xf]
        %v320 = vld [vmem:[#allocation5 + $0x1c] sm:$0xf]
        %v321 = vld [vmem:[#allocation5 + $0x20] sm:$0xf]
        %v322 = vld [vmem:[#allocation5 + $0x24] sm:$0xf]
        %v323 = vld [vmem:[#allocation5 + $0x28] sm:$0xf]
        %v324 = vld [vmem:[#allocation5 + $0x2c] sm:$0xf]
        %v325 = vld [vmem:[#allocation5 + $0x30] sm:$0xf]
        %v326 = vld [vmem:[#allocation5 + $0x34] sm:$0xf]
        %v327 = vld [vmem:[#allocation5 + $0x38] sm:$0xf]
        %v328 = vld [vmem:[#allocation5 + $0x3c] sm:$0xf]
        %v329 = vld [vmem:[#allocation5 + $0x40] sm:$0xf]
        %v330 = vld [vmem:[#allocation5 + $0x44] sm:$0xf]
        %v331 = vld [vmem:[#allocation5 + $0x48] sm:$0xf]
        %v332 = vld [vmem:[#allocation5 + $0x4c] sm:$0xf]
        %v333 = vld [vmem:[#allocation5 + $0x50] sm:$0xf]
        %v334 = vld [vmem:[#allocation5 + $0x54] sm:$0xf]
        %v335 = vld [vmem:[#allocation5 + $0x58] sm:$0xf]
        %v336 = vld [vmem:[#allocation5 + $0x5c] sm:$0xf]
        %v337 = vld [vmem:[#allocation5 + $0x60] sm:$0xf]
        %v338 = vld [vmem:[#allocation5 + $0x64] sm:$0xf]
        %v339 = vld [vmem:[#allocation5 + $0x68] sm:$0xf]
        %v340 = vld [vmem:[#allocation5 + $0x6c] sm:$0xf]
        %v341 = vld [vmem:[#allocation5 + $0x70] sm:$0xf]
        %v342 = vld [vmem:[#allocation5 + $0x74] sm:$0xf]
        %v343 = vld [vmem:[#allocation5 + $0x78] sm:$0xf]
        %v344 = vld [vmem:[#allocation5 + $0x7c] sm:$0xf]
        %v409 = vunpack.c.l.b16 %v249
        %v410 = vunpack.c.h.b16 %v249
        %v411 = vunpack.c.l.b16 %v250
        %v412 = vunpack.c.h.b16 %v250
        %v413 = vunpack.c.l.b16 %v251
        %v414 = vunpack.c.h.b16 %v251
        %v415 = vunpack.c.l.b16 %v252
        %v416 = vunpack.c.h.b16 %v252
        %v417 = vunpack.c.l.b16 %v253
        %v418 = vunpack.c.h.b16 %v253
        %v419 = vunpack.c.l.b16 %v254
        %v420 = vunpack.c.h.b16 %v254
        %v421 = vunpack.c.l.b16 %v255
        %v422 = vunpack.c.h.b16 %v255
        %v423 = vunpack.c.l.b16 %v256
        %v424 = vunpack.c.h.b16 %v256
        %v425 = vunpack.c.l.b16 %v257
        %v426 = vunpack.c.h.b16 %v257
        %v427 = vunpack.c.l.b16 %v258
        %v428 = vunpack.c.h.b16 %v258
        %v429 = vunpack.c.l.b16 %v259
        %v430 = vunpack.c.h.b16 %v259
        %v431 = vunpack.c.l.b16 %v260
        %v432 = vunpack.c.h.b16 %v260
        %v433 = vunpack.c.l.b16 %v261
        %v434 = vunpack.c.h.b16 %v261
        %v435 = vunpack.c.l.b16 %v262
        %v436 = vunpack.c.h.b16 %v262
        %v437 = vunpack.c.l.b16 %v263
        %v438 = vunpack.c.h.b16 %v263
        %v439 = vunpack.c.l.b16 %v264
        %v440 = vunpack.c.h.b16 %v264
        %v441 = vunpack.c.l.b16 %v265
        %v442 = vunpack.c.h.b16 %v265
        %v443 = vunpack.c.l.b16 %v266
        %v444 = vunpack.c.h.b16 %v266
        %v445 = vunpack.c.l.b16 %v267
        %v446 = vunpack.c.h.b16 %v267
        %v447 = vunpack.c.l.b16 %v268
        %v448 = vunpack.c.h.b16 %v268
        %v449 = vunpack.c.l.b16 %v269
        %v450 = vunpack.c.h.b16 %v269
        %v451 = vunpack.c.l.b16 %v270
        %v452 = vunpack.c.h.b16 %v270
        %v453 = vunpack.c.l.b16 %v271
        %v454 = vunpack.c.h.b16 %v271
        %v455 = vunpack.c.l.b16 %v272
        %v456 = vunpack.c.h.b16 %v272
        %v457 = vunpack.c.l.b16 %v273
        %v458 = vunpack.c.h.b16 %v273
        %v459 = vunpack.c.l.b16 %v274
        %v460 = vunpack.c.h.b16 %v274
        %v461 = vunpack.c.l.b16 %v275
        %v462 = vunpack.c.h.b16 %v275
        %v463 = vunpack.c.l.b16 %v276
        %v464 = vunpack.c.h.b16 %v276
        %v465 = vunpack.c.l.b16 %v277
        %v466 = vunpack.c.h.b16 %v277
        %v467 = vunpack.c.l.b16 %v278
        %v468 = vunpack.c.h.b16 %v278
        %v469 = vunpack.c.l.b16 %v279
        %v470 = vunpack.c.h.b16 %v279
        %v471 = vunpack.c.l.b16 %v280
        %v472 = vunpack.c.h.b16 %v280
        %v473 = vunpack.c.l.b16 %v281
        %v474 = vunpack.c.h.b16 %v281
        %v475 = vunpack.c.l.b16 %v282
        %v476 = vunpack.c.h.b16 %v282
        %v477 = vunpack.c.l.b16 %v283
        %v478 = vunpack.c.h.b16 %v283
        %v479 = vunpack.c.l.b16 %v284
        %v480 = vunpack.c.h.b16 %v284
        %v481 = vunpack.c.l.b16 %v285
        %v482 = vunpack.c.h.b16 %v285
        %v483 = vunpack.c.l.b16 %v286
        %v484 = vunpack.c.h.b16 %v286
        %v485 = vunpack.c.l.b16 %v287
        %v486 = vunpack.c.h.b16 %v287
        %v487 = vunpack.c.l.b16 %v288
        %v488 = vunpack.c.h.b16 %v288
        %v489 = vunpack.c.l.b16 %v289
        %v490 = vunpack.c.h.b16 %v289
        %v491 = vunpack.c.l.b16 %v290
        %v492 = vunpack.c.h.b16 %v290
        %v493 = vunpack.c.l.b16 %v291
        %v494 = vunpack.c.h.b16 %v291
        %v495 = vunpack.c.l.b16 %v292
        %v496 = vunpack.c.h.b16 %v292
        %v497 = vunpack.c.l.b16 %v293
        %v498 = vunpack.c.h.b16 %v293
        %v499 = vunpack.c.l.b16 %v294
        %v500 = vunpack.c.h.b16 %v294
        %v501 = vunpack.c.l.b16 %v295
        %v502 = vunpack.c.h.b16 %v295
        %v503 = vunpack.c.l.b16 %v296
        %v504 = vunpack.c.h.b16 %v296
        %v505 = vunpack.c.l.b16 %v297
        %v506 = vunpack.c.h.b16 %v297
        %v507 = vunpack.c.l.b16 %v298
        %v508 = vunpack.c.h.b16 %v298
        %v509 = vunpack.c.l.b16 %v299
        %v510 = vunpack.c.h.b16 %v299
        %v511 = vunpack.c.l.b16 %v300
        %v512 = vunpack.c.h.b16 %v300
        %v513 = vunpack.c.l.b16 %v301
        %v514 = vunpack.c.h.b16 %v301
        %v515 = vunpack.c.l.b16 %v302
        %v516 = vunpack.c.h.b16 %v302
        %v517 = vunpack.c.l.b16 %v303
        %v518 = vunpack.c.h.b16 %v303
        %v519 = vunpack.c.l.b16 %v304
        %v520 = vunpack.c.h.b16 %v304
        %v521 = vunpack.c.l.b16 %v305
        %v522 = vunpack.c.h.b16 %v305
        %v523 = vunpack.c.l.b16 %v306
        %v524 = vunpack.c.h.b16 %v306
        %v525 = vunpack.c.l.b16 %v307
        %v526 = vunpack.c.h.b16 %v307
        %v527 = vunpack.c.l.b16 %v308
        %v528 = vunpack.c.h.b16 %v308
        %v529 = vunpack.c.l.b16 %v309
        %v530 = vunpack.c.h.b16 %v309
        %v531 = vunpack.c.l.b16 %v310
        %v532 = vunpack.c.h.b16 %v310
        %v533 = vunpack.c.l.b16 %v311
        %v534 = vunpack.c.h.b16 %v311
        %v535 = vunpack.c.l.b16 %v312
        %v536 = vunpack.c.h.b16 %v312
        %v537 = vpack.c.b16 %v411, %v409
        %v538 = vpack.c.b16 %v412, %v410
        %v539 = vpack.c.b16 %v415, %v413
        %v540 = vpack.c.b16 %v416, %v414
        %v541 = vpack.c.b16 %v419, %v417
        %v542 = vpack.c.b16 %v420, %v418
        %v543 = vpack.c.b16 %v423, %v421
        %v544 = vpack.c.b16 %v424, %v422
        %v545 = vpack.c.b16 %v427, %v425
        %v546 = vpack.c.b16 %v428, %v426
        %v547 = vpack.c.b16 %v431, %v429
        %v548 = vpack.c.b16 %v432, %v430
        %v549 = vpack.c.b16 %v435, %v433
        %v550 = vpack.c.b16 %v436, %v434
        %v551 = vpack.c.b16 %v439, %v437
        %v552 = vpack.c.b16 %v440, %v438
        %v553 = vpack.c.b16 %v443, %v441
        %v554 = vpack.c.b16 %v444, %v442
        %v555 = vpack.c.b16 %v447, %v445
        %v556 = vpack.c.b16 %v448, %v446
        %v557 = vpack.c.b16 %v451, %v449
        %v558 = vpack.c.b16 %v452, %v450
        %v559 = vpack.c.b16 %v455, %v453
        %v560 = vpack.c.b16 %v456, %v454
        %v561 = vpack.c.b16 %v459, %v457
        %v562 = vpack.c.b16 %v460, %v458
        %v563 = vpack.c.b16 %v463, %v461
        %v564 = vpack.c.b16 %v464, %v462
        %v565 = vpack.c.b16 %v467, %v465
        %v566 = vpack.c.b16 %v468, %v466
        %v567 = vpack.c.b16 %v471, %v469
        %v568 = vpack.c.b16 %v472, %v470
        %v569 = vpack.c.b16 %v475, %v473
        %v570 = vpack.c.b16 %v476, %v474
        %v571 = vpack.c.b16 %v479, %v477
        %v572 = vpack.c.b16 %v480, %v478
        %v573 = vpack.c.b16 %v483, %v481
        %v574 = vpack.c.b16 %v484, %v482
        %v575 = vpack.c.b16 %v487, %v485
        %v576 = vpack.c.b16 %v488, %v486
        %v577 = vpack.c.b16 %v491, %v489
        %v578 = vpack.c.b16 %v492, %v490
        %v579 = vpack.c.b16 %v495, %v493
        %v580 = vpack.c.b16 %v496, %v494
        %v581 = vpack.c.b16 %v499, %v497
        %v582 = vpack.c.b16 %v500, %v498
        %v583 = vpack.c.b16 %v503, %v501
        %v584 = vpack.c.b16 %v504, %v502
        %v585 = vpack.c.b16 %v507, %v505
        %v586 = vpack.c.b16 %v508, %v506
        %v587 = vpack.c.b16 %v511, %v509
        %v588 = vpack.c.b16 %v512, %v510
        %v589 = vpack.c.b16 %v515, %v513
        %v590 = vpack.c.b16 %v516, %v514
        %v591 = vpack.c.b16 %v519, %v517
        %v592 = vpack.c.b16 %v520, %v518
        %v593 = vpack.c.b16 %v523, %v521
        %v594 = vpack.c.b16 %v524, %v522
        %v595 = vpack.c.b16 %v527, %v525
        %v596 = vpack.c.b16 %v528, %v526
        %v597 = vpack.c.b16 %v531, %v529
        %v598 = vpack.c.b16 %v532, %v530
        %v599 = vpack.c.b16 %v535, %v533
        %v600 = vpack.c.b16 %v536, %v534
        %v697 = vunpack.c.l.b16 %v313
        %v698 = vunpack.c.l.b16 %v314
        %v699 = vunpack.c.l.b16 %v315
        %v700 = vunpack.c.l.b16 %v316
        %v701 = vunpack.c.l.b16 %v317
        %v702 = vunpack.c.l.b16 %v318
        %v703 = vunpack.c.l.b16 %v319
        %v704 = vunpack.c.l.b16 %v320
        %v705 = vunpack.c.l.b16 %v321
        %v706 = vunpack.c.l.b16 %v322
        %v707 = vunpack.c.l.b16 %v323
        %v708 = vunpack.c.l.b16 %v324
        %v709 = vunpack.c.l.b16 %v325
        %v710 = vunpack.c.l.b16 %v326
        %v711 = vunpack.c.l.b16 %v327
        %v712 = vunpack.c.l.b16 %v328
        %v713 = vunpack.c.l.b16 %v329
        %v714 = vunpack.c.l.b16 %v330
        %v715 = vunpack.c.l.b16 %v331
        %v716 = vunpack.c.l.b16 %v332
        %v717 = vunpack.c.l.b16 %v333
        %v718 = vunpack.c.l.b16 %v334
        %v719 = vunpack.c.l.b16 %v335
        %v720 = vunpack.c.l.b16 %v336
        %v721 = vunpack.c.l.b16 %v337
        %v722 = vunpack.c.l.b16 %v338
        %v723 = vunpack.c.l.b16 %v339
        %v724 = vunpack.c.l.b16 %v340
        %v725 = vunpack.c.l.b16 %v341
        %v726 = vunpack.c.l.b16 %v342
        %v727 = vunpack.c.l.b16 %v343
        %v728 = vunpack.c.l.b16 %v344
        %v729 = vpack.c.b16 %v698, %v697
        %v730 = vpack.c.b16 %v700, %v699
        %v731 = vpack.c.b16 %v702, %v701
        %v732 = vpack.c.b16 %v704, %v703
        %v733 = vpack.c.b16 %v706, %v705
        %v734 = vpack.c.b16 %v708, %v707
        %v735 = vpack.c.b16 %v710, %v709
        %v736 = vpack.c.b16 %v712, %v711
        %v737 = vpack.c.b16 %v714, %v713
        %v738 = vpack.c.b16 %v716, %v715
        %v739 = vpack.c.b16 %v718, %v717
        %v740 = vpack.c.b16 %v720, %v719
        %v741 = vpack.c.b16 %v722, %v721
        %v742 = vpack.c.b16 %v724, %v723
        %v743 = vpack.c.b16 %v726, %v725
        %v744 = vpack.c.b16 %v728, %v727
        %761 = vmatprep.subr.bf16.mxu0 0
        %762 = vmatpush1.bf16.msra.mxu0 %v729
        %763 = vmatprep.subr.bf16.mxu0 0
        %764 = vmatpush1.bf16.msra.mxu0 %v730
        %765 = vmatprep.subr.bf16.mxu0 0
        %766 = vmatpush1.bf16.msra.mxu0 %v731
        %767 = vmatprep.subr.bf16.mxu0 0
        %768 = vmatpush1.bf16.msra.mxu0 %v732
        %769 = vmatprep.subr.bf16.mxu0 0
        %770 = vmatpush1.bf16.msra.mxu0 %v733
        %771 = vmatprep.subr.bf16.mxu0 0
        %772 = vmatpush1.bf16.msra.mxu0 %v734
        %773 = vmatprep.subr.bf16.mxu0 0
        %774 = vmatpush1.bf16.msra.mxu0 %v735
        %775 = vmatprep.subr.bf16.mxu0 0
        %776 = vmatpush1.bf16.msra.mxu0 %v736
        %777 = vmatprep.subr.bf16.mxu0 0
        %778 = vmatpush1.bf16.msra.mxu0 %v737
        %779 = vmatprep.subr.bf16.mxu0 0
        %780 = vmatpush1.bf16.msra.mxu0 %v738
        %781 = vmatprep.subr.bf16.mxu0 0
        %782 = vmatpush1.bf16.msra.mxu0 %v739
        %783 = vmatprep.subr.bf16.mxu0 0
        %784 = vmatpush1.bf16.msra.mxu0 %v740
        %785 = vmatprep.subr.bf16.mxu0 0
        %786 = vmatpush1.bf16.msra.mxu0 %v741
        %787 = vmatprep.subr.bf16.mxu0 0
        %788 = vmatpush1.bf16.msra.mxu0 %v742
        %789 = vmatprep.subr.bf16.mxu0 0
        %790 = vmatpush1.bf16.msra.mxu0 %v743
        %791 = vmatprep.subr.bf16.mxu0 0
        %792 = vmatpush1.bf16.msra.mxu0 %v744
        %793 = vmatprep.mubr.bf16.mxu0 %v538
        %794 = vmatmul.mubr.bf16.gmra.mrb[0].mxu0 %v537
        %v795 = vpop.f32.mrb[0].mxu0
        %v796 = vadd.f32 0.0, %v795
        %v797 = vpop.f32.mrb[0].mxu0
        %v798 = vpop.f32.mrb[0].mxu0
        %v799 = vadd.f32 0.0, %v798
        %v800 = vpop.f32.mrb[0].mxu0
        %801 = vmatprep.mubr.bf16.mxu0 %v540
        %802 = vmatmul.mubr.bf16.gmra.mrb[0].mxu0 %v539
        %v803 = vpop.f32.mrb[0].mxu0
        %v804 = vadd.f32 0.0, %v803
        %v805 = vpop.f32.mrb[0].mxu0
        %v806 = vpop.f32.mrb[0].mxu0
        %v807 = vadd.f32 0.0, %v806
        %v808 = vpop.f32.mrb[0].mxu0
        %809 = vmatprep.mubr.bf16.mxu0 %v542
        %810 = vmatmul.mubr.bf16.gmra.mrb[0].mxu0 %v541
        %v811 = vpop.f32.mrb[0].mxu0
        %v812 = vadd.f32 0.0, %v811
        %v813 = vpop.f32.mrb[0].mxu0
        %v814 = vpop.f32.mrb[0].mxu0
        %v815 = vadd.f32 0.0, %v814
        %v816 = vpop.f32.mrb[0].mxu0
        %817 = vmatprep.mubr.bf16.mxu0 %v544
        %818 = vmatmul.mubr.bf16.gmra.mrb[0].mxu0 %v543
        %v819 = vpop.f32.mrb[0].mxu0
        %v820 = vadd.f32 0.0, %v819
        %v821 = vpop.f32.mrb[0].mxu0
        %v822 = vpop.f32.mrb[0].mxu0
        %v823 = vadd.f32 0.0, %v822
        %v824 = vpop.f32.mrb[0].mxu0
        %825 = vmatprep.mubr.bf16.mxu0 %v546
        %826 = vmatmul.mubr.bf16.gmra.mrb[0].mxu0 %v545
        %v827 = vpop.f32.mrb[0].mxu0
        %v828 = vadd.f32 0.0, %v827
        %v829 = vpop.f32.mrb[0].mxu0
        %v830 = vpop.f32.mrb[0].mxu0
        %v831 = vadd.f32 0.0, %v830
        %v832 = vpop.f32.mrb[0].mxu0
        %833 = vmatprep.mubr.bf16.mxu0 %v548
        %834 = vmatmul.mubr.bf16.gmra.mrb[0].mxu0 %v547
        %v835 = vpop.f32.mrb[0].mxu0
        %v836 = vadd.f32 0.0, %v835
        %v837 = vpop.f32.mrb[0].mxu0
        %v838 = vpop.f32.mrb[0].mxu0
        %v839 = vadd.f32 0.0, %v838
        %v840 = vpop.f32.mrb[0].mxu0
        %841 = vmatprep.mubr.bf16.mxu0 %v550
        %842 = vmatmul.mubr.bf16.gmra.mrb[0].mxu0 %v549
        %v843 = vpop.f32.mrb[0].mxu0
        %v844 = vadd.f32 0.0, %v843
        %v845 = vpop.f32.mrb[0].mxu0
        %v846 = vpop.f32.mrb[0].mxu0
        %v847 = vadd.f32 0.0, %v846
        %v848 = vpop.f32.mrb[0].mxu0
        %849 = vmatprep.mubr.bf16.mxu0 %v552
        %850 = vmatmul.mubr.bf16.gmra.mrb[0].mxu0 %v551
        %v851 = vpop.f32.mrb[0].mxu0
        %v852 = vadd.f32 0.0, %v851
        %v853 = vpop.f32.mrb[0].mxu0
        %v854 = vpop.f32.mrb[0].mxu0
        %v855 = vadd.f32 0.0, %v854
        %v856 = vpop.f32.mrb[0].mxu0
        %857 = vmatprep.mubr.bf16.mxu0 %v554
        %858 = vmatmul.mubr.bf16.gmra.mrb[0].mxu0 %v553
        %v859 = vpop.f32.mrb[0].mxu0
        %v860 = vadd.f32 0.0, %v859
        %v861 = vpop.f32.mrb[0].mxu0
        %v862 = vpop.f32.mrb[0].mxu0
        %v863 = vadd.f32 0.0, %v862
        %v864 = vpop.f32.mrb[0].mxu0
        %865 = vmatprep.mubr.bf16.mxu0 %v556
        %866 = vmatmul.mubr.bf16.gmra.mrb[0].mxu0 %v555
        %v867 = vpop.f32.mrb[0].mxu0
        %v868 = vadd.f32 0.0, %v867
        %v869 = vpop.f32.mrb[0].mxu0
        %v870 = vpop.f32.mrb[0].mxu0
        %v871 = vadd.f32 0.0, %v870
        %v872 = vpop.f32.mrb[0].mxu0
        %873 = vmatprep.mubr.bf16.mxu0 %v558
        %874 = vmatmul.mubr.bf16.gmra.mrb[0].mxu0 %v557
        %v875 = vpop.f32.mrb[0].mxu0
        %v876 = vadd.f32 0.0, %v875
        %v877 = vpop.f32.mrb[0].mxu0
        %v878 = vpop.f32.mrb[0].mxu0
        %v879 = vadd.f32 0.0, %v878
        %v880 = vpop.f32.mrb[0].mxu0
        %881 = vmatprep.mubr.bf16.mxu0 %v560
        %882 = vmatmul.mubr.bf16.gmra.mrb[0].mxu0 %v559
        %v883 = vpop.f32.mrb[0].mxu0
        %v884 = vadd.f32 0.0, %v883
        %v885 = vpop.f32.mrb[0].mxu0
        %v886 = vpop.f32.mrb[0].mxu0
        %v887 = vadd.f32 0.0, %v886
        %v888 = vpop.f32.mrb[0].mxu0
        %889 = vmatprep.mubr.bf16.mxu0 %v562
        %890 = vmatmul.mubr.bf16.gmra.mrb[0].mxu0 %v561
        %v891 = vpop.f32.mrb[0].mxu0
        %v892 = vadd.f32 0.0, %v891
        %v893 = vpop.f32.mrb[0].mxu0
        %v894 = vpop.f32.mrb[0].mxu0
        %v895 = vadd.f32 0.0, %v894
        %v896 = vpop.f32.mrb[0].mxu0
        %897 = vmatprep.mubr.bf16.mxu0 %v564
        %898 = vmatmul.mubr.bf16.gmra.mrb[0].mxu0 %v563
        %v899 = vpop.f32.mrb[0].mxu0
        %v900 = vadd.f32 0.0, %v899
        %v901 = vpop.f32.mrb[0].mxu0
        %v902 = vpop.f32.mrb[0].mxu0
        %v903 = vadd.f32 0.0, %v902
        %v904 = vpop.f32.mrb[0].mxu0
        %905 = vmatprep.mubr.bf16.mxu0 %v566
        %906 = vmatmul.mubr.bf16.gmra.mrb[0].mxu0 %v565
        %v907 = vpop.f32.mrb[0].mxu0
        %v908 = vadd.f32 0.0, %v907
        %v909 = vpop.f32.mrb[0].mxu0
        %v910 = vpop.f32.mrb[0].mxu0
        %v911 = vadd.f32 0.0, %v910
        %v912 = vpop.f32.mrb[0].mxu0
        %913 = vmatprep.mubr.bf16.mxu0 %v568
        %914 = vmatmul.mubr.bf16.gmra.mrb[0].mxu0 %v567
        %v915 = vpop.f32.mrb[0].mxu0
        %v916 = vadd.f32 0.0, %v915
        %v917 = vpop.f32.mrb[0].mxu0
        %v918 = vpop.f32.mrb[0].mxu0
        %v919 = vadd.f32 0.0, %v918
        %v920 = vpop.f32.mrb[0].mxu0
        %921 = vmatprep.mubr.bf16.mxu0 %v570
        %922 = vmatmul.mubr.bf16.gmra.mrb[0].mxu0 %v569
        %v923 = vpop.f32.mrb[0].mxu0
        %v924 = vadd.f32 0.0, %v923
        %v925 = vpop.f32.mrb[0].mxu0
        %v926 = vpop.f32.mrb[0].mxu0
        %v927 = vadd.f32 0.0, %v926
        %v928 = vpop.f32.mrb[0].mxu0
        %929 = vmatprep.mubr.bf16.mxu0 %v572
        %930 = vmatmul.mubr.bf16.gmra.mrb[0].mxu0 %v571
        %v931 = vpop.f32.mrb[0].mxu0
        %v932 = vadd.f32 0.0, %v931
        %v933 = vpop.f32.mrb[0].mxu0
        %v934 = vpop.f32.mrb[0].mxu0
        %v935 = vadd.f32 0.0, %v934
        %v936 = vpop.f32.mrb[0].mxu0
        %937 = vmatprep.mubr.bf16.mxu0 %v574
        %938 = vmatmul.mubr.bf16.gmra.mrb[0].mxu0 %v573
        %v939 = vpop.f32.mrb[0].mxu0
        %v940 = vadd.f32 0.0, %v939
        %v941 = vpop.f32.mrb[0].mxu0
        %v942 = vpop.f32.mrb[0].mxu0
        %v943 = vadd.f32 0.0, %v942
        %v944 = vpop.f32.mrb[0].mxu0
        %945 = vmatprep.mubr.bf16.mxu0 %v576
        %946 = vmatmul.mubr.bf16.gmra.mrb[0].mxu0 %v575
        %v947 = vpop.f32.mrb[0].mxu0
        %v948 = vadd.f32 0.0, %v947
        %v949 = vpop.f32.mrb[0].mxu0
        %v950 = vpop.f32.mrb[0].mxu0
        %v951 = vadd.f32 0.0, %v950
        %v952 = vpop.f32.mrb[0].mxu0
        %953 = vmatprep.mubr.bf16.mxu0 %v578
        %954 = vmatmul.mubr.bf16.gmra.mrb[0].mxu0 %v577
        %v955 = vpop.f32.mrb[0].mxu0
        %v956 = vadd.f32 0.0, %v955
        %v957 = vpop.f32.mrb[0].mxu0
        %v958 = vpop.f32.mrb[0].mxu0
        %v959 = vadd.f32 0.0, %v958
        %v960 = vpop.f32.mrb[0].mxu0
        %961 = vmatprep.mubr.bf16.mxu0 %v580
        %962 = vmatmul.mubr.bf16.gmra.mrb[0].mxu0 %v579
        %v963 = vpop.f32.mrb[0].mxu0
        %v964 = vadd.f32 0.0, %v963
        %v965 = vpop.f32.mrb[0].mxu0
        %v966 = vpop.f32.mrb[0].mxu0
        %v967 = vadd.f32 0.0, %v966
        %v968 = vpop.f32.mrb[0].mxu0
        %969 = vmatprep.mubr.bf16.mxu0 %v582
        %970 = vmatmul.mubr.bf16.gmra.mrb[0].mxu0 %v581
        %v971 = vpop.f32.mrb[0].mxu0
        %v972 = vadd.f32 0.0, %v971
        %v973 = vpop.f32.mrb[0].mxu0
        %v974 = vpop.f32.mrb[0].mxu0
        %v975 = vadd.f32 0.0, %v974
        %v976 = vpop.f32.mrb[0].mxu0
        %977 = vmatprep.mubr.bf16.mxu0 %v584
        %978 = vmatmul.mubr.bf16.gmra.mrb[0].mxu0 %v583
        %v979 = vpop.f32.mrb[0].mxu0
        %v980 = vadd.f32 0.0, %v979
        %v981 = vpop.f32.mrb[0].mxu0
        %v982 = vpop.f32.mrb[0].mxu0
        %v983 = vadd.f32 0.0, %v982
        %v984 = vpop.f32.mrb[0].mxu0
        %985 = vmatprep.mubr.bf16.mxu0 %v586
        %986 = vmatmul.mubr.bf16.gmra.mrb[0].mxu0 %v585
        %v987 = vpop.f32.mrb[0].mxu0
        %v988 = vadd.f32 0.0, %v987
        %v989 = vpop.f32.mrb[0].mxu0
        %v990 = vpop.f32.mrb[0].mxu0
        %v991 = vadd.f32 0.0, %v990
        %v992 = vpop.f32.mrb[0].mxu0
        %993 = vmatprep.mubr.bf16.mxu0 %v588
        %994 = vmatmul.mubr.bf16.gmra.mrb[0].mxu0 %v587
        %v995 = vpop.f32.mrb[0].mxu0
        %v996 = vadd.f32 0.0, %v995
        %v997 = vpop.f32.mrb[0].mxu0
        %v998 = vpop.f32.mrb[0].mxu0
        %v999 = vadd.f32 0.0, %v998
        %v1000 = vpop.f32.mrb[0].mxu0
        %1001 = vmatprep.mubr.bf16.mxu0 %v590
        %1002 = vmatmul.mubr.bf16.gmra.mrb[0].mxu0 %v589
        %v1003 = vpop.f32.mrb[0].mxu0
        %v1004 = vadd.f32 0.0, %v1003
        %v1005 = vpop.f32.mrb[0].mxu0
        %v1006 = vpop.f32.mrb[0].mxu0
        %v1007 = vadd.f32 0.0, %v1006
        %v1008 = vpop.f32.mrb[0].mxu0
        %1009 = vmatprep.mubr.bf16.mxu0 %v592
        %1010 = vmatmul.mubr.bf16.gmra.mrb[0].mxu0 %v591
        %v1011 = vpop.f32.mrb[0].mxu0
        %v1012 = vadd.f32 0.0, %v1011
        %v1013 = vpop.f32.mrb[0].mxu0
        %v1014 = vpop.f32.mrb[0].mxu0
        %v1015 = vadd.f32 0.0, %v1014
        %v1016 = vpop.f32.mrb[0].mxu0
        %1017 = vmatprep.mubr.bf16.mxu0 %v594
        %1018 = vmatmul.mubr.bf16.gmra.mrb[0].mxu0 %v593
        %v1019 = vpop.f32.mrb[0].mxu0
        %v1020 = vadd.f32 0.0, %v1019
        %v1021 = vpop.f32.mrb[0].mxu0
        %v1022 = vpop.f32.mrb[0].mxu0
        %v1023 = vadd.f32 0.0, %v1022
        %v1024 = vpop.f32.mrb[0].mxu0
        %1025 = vmatprep.mubr.bf16.mxu0 %v596
        %1026 = vmatmul.mubr.bf16.gmra.mrb[0].mxu0 %v595
        %v1027 = vpop.f32.mrb[0].mxu0
        %v1028 = vadd.f32 0.0, %v1027
        %v1029 = vpop.f32.mrb[0].mxu0
        %v1030 = vpop.f32.mrb[0].mxu0
        %v1031 = vadd.f32 0.0, %v1030
        %v1032 = vpop.f32.mrb[0].mxu0
        %1033 = vmatprep.mubr.bf16.mxu0 %v598
        %1034 = vmatmul.mubr.bf16.gmra.mrb[0].mxu0 %v597
        %v1035 = vpop.f32.mrb[0].mxu0
        %v1036 = vadd.f32 0.0, %v1035
        %v1037 = vpop.f32.mrb[0].mxu0
        %v1038 = vpop.f32.mrb[0].mxu0
        %v1039 = vadd.f32 0.0, %v1038
        %v1040 = vpop.f32.mrb[0].mxu0
        %1041 = vmatprep.mubr.bf16.mxu0 %v600
        %1042 = vmatmul.mubr.bf16.gmra.mrb[0].mxu0 %v599
        %v1043 = vpop.f32.mrb[0].mxu0
        %v1044 = vadd.f32 0.0, %v1043
        %v1045 = vpop.f32.mrb[0].mxu0
        %v1046 = vpop.f32.mrb[0].mxu0
        %v1047 = vadd.f32 0.0, %v1046
        %v1048 = vpop.f32.mrb[0].mxu0
        %1049 = vdwg.mxu0
        %v1050 = vadd.f32 %v796, %v860
        %v1051 = vadd.f32 %v1050, %v924
        %v1052 = vadd.f32 %v1051, %v988
        %v1053 = vadd.f32 %v799, %v863
        %v1054 = vadd.f32 %v1053, %v927
        %v1055 = vadd.f32 %v1054, %v991
        %v1056 = vadd.f32 %v804, %v868
        %v1057 = vadd.f32 %v1056, %v932
        %v1058 = vadd.f32 %v1057, %v996
        %v1059 = vadd.f32 %v807, %v871
        %v1060 = vadd.f32 %v1059, %v935
        %v1061 = vadd.f32 %v1060, %v999
        %v1062 = vadd.f32 %v812, %v876
        %v1063 = vadd.f32 %v1062, %v940
        %v1064 = vadd.f32 %v1063, %v1004
        %v1065 = vadd.f32 %v815, %v879
        %v1066 = vadd.f32 %v1065, %v943
        %v1067 = vadd.f32 %v1066, %v1007
        %v1068 = vadd.f32 %v820, %v884
        %v1069 = vadd.f32 %v1068, %v948
        %v1070 = vadd.f32 %v1069, %v1012
        %v1071 = vadd.f32 %v823, %v887
        %v1072 = vadd.f32 %v1071, %v951
        %v1073 = vadd.f32 %v1072, %v1015
        %v1074 = vadd.f32 %v828, %v892
        %v1075 = vadd.f32 %v1074, %v956
        %v1076 = vadd.f32 %v1075, %v1020
        %v1077 = vadd.f32 %v831, %v895
        %v1078 = vadd.f32 %v1077, %v959
        %v1079 = vadd.f32 %v1078, %v1023
        %v1080 = vadd.f32 %v836, %v900
        %v1081 = vadd.f32 %v1080, %v964
        %v1082 = vadd.f32 %v1081, %v1028
        %v1083 = vadd.f32 %v839, %v903
        %v1084 = vadd.f32 %v1083, %v967
        %v1085 = vadd.f32 %v1084, %v1031
        %v1086 = vadd.f32 %v844, %v908
        %v1087 = vadd.f32 %v1086, %v972
        %v1088 = vadd.f32 %v1087, %v1036
        %v1089 = vadd.f32 %v847, %v911
        %v1090 = vadd.f32 %v1089, %v975
        %v1091 = vadd.f32 %v1090, %v1039
        %v1092 = vadd.f32 %v852, %v916
        %v1093 = vadd.f32 %v1092, %v980
        %v1094 = vadd.f32 %v1093, %v1044
        %v1095 = vadd.f32 %v855, %v919
        %v1096 = vadd.f32 %v1095, %v983
        %v1097 = vadd.f32 %v1096, %v1047
        %v1098 = vpack.c.bf16 %v1055, %v1052
        %v1099 = vpack.c.bf16 %v1061, %v1058
        %v1100 = vpack.c.bf16 %v1067, %v1064
        %v1101 = vpack.c.bf16 %v1073, %v1070
        %v1102 = vpack.c.bf16 %v1079, %v1076
        %v1103 = vpack.c.bf16 %v1085, %v1082
        %v1104 = vpack.c.bf16 %v1091, %v1088
        %v1105 = vpack.c.bf16 %v1097, %v1094
        %v1106 = vld [vmem:[#allocation7] sm:$0xf]
        %v1107 = vld [vmem:[#allocation7 + $0x4] sm:$0xf]
        %v1108 = vld [vmem:[#allocation7 + $0x8] sm:$0xf]
        %v1109 = vld [vmem:[#allocation7 + $0xc] sm:$0xf]
        %v1110 = vld [vmem:[#allocation7 + $0x10] sm:$0xf]
        %v1111 = vld [vmem:[#allocation7 + $0x14] sm:$0xf]
        %v1112 = vld [vmem:[#allocation7 + $0x18] sm:$0xf]
        %v1113 = vld [vmem:[#allocation7 + $0x1c] sm:$0xf]
        %v1114 = vld [vmem:[#allocation7 + $0x20] sm:$0xf]
        %v1115 = vld [vmem:[#allocation7 + $0x24] sm:$0xf]
        %v1116 = vld [vmem:[#allocation7 + $0x28] sm:$0xf]
        %v1117 = vld [vmem:[#allocation7 + $0x2c] sm:$0xf]
        %v1118 = vld [vmem:[#allocation7 + $0x30] sm:$0xf]
        %v1119 = vld [vmem:[#allocation7 + $0x34] sm:$0xf]
        %v1120 = vld [vmem:[#allocation7 + $0x38] sm:$0xf]
        %v1121 = vld [vmem:[#allocation7 + $0x3c] sm:$0xf]
        %v1122 = vld [vmem:[%s3] sm:$0x1]
        %v1124 = vlaneseq
        %v1125 = vshrl.u32 %v1124, 7
        %v1126 = vsub.s32 0, %v1125
        %v1127 = vrot.slane %v1122, %v1126
        %v1145 = vunpack.c.l.b16 %v1106
        %v1146 = vunpack.c.l.b16 %v1107
        %v1147 = vunpack.c.l.b16 %v1108
        %v1148 = vunpack.c.l.b16 %v1109
        %v1149 = vunpack.c.l.b16 %v1110
        %v1150 = vunpack.c.l.b16 %v1111
        %v1151 = vunpack.c.l.b16 %v1112
        %v1152 = vunpack.c.l.b16 %v1113
        %v1153 = vunpack.c.l.b16 %v1114
        %v1154 = vunpack.c.l.b16 %v1115
        %v1155 = vunpack.c.l.b16 %v1116
        %v1156 = vunpack.c.l.b16 %v1117
        %v1157 = vunpack.c.l.b16 %v1118
        %v1158 = vunpack.c.l.b16 %v1119
        %v1159 = vunpack.c.l.b16 %v1120
        %v1160 = vunpack.c.l.b16 %v1121
        %v1161 = vpack.c.b16 %v1146, %v1145
        %v1162 = vpack.c.b16 %v1148, %v1147
        %v1163 = vpack.c.b16 %v1150, %v1149
        %v1164 = vpack.c.b16 %v1152, %v1151
        %v1165 = vpack.c.b16 %v1154, %v1153
        %v1166 = vpack.c.b16 %v1156, %v1155
        %v1167 = vpack.c.b16 %v1158, %v1157
        %v1168 = vpack.c.b16 %v1160, %v1159
        %1177 = vmatprep.subr.bf16.mxu0 0
        %1178 = vmatpush1.bf16.msra.mxu0 %v1161
        %1179 = vmatprep.subr.bf16.mxu0 0
        %1180 = vmatpush1.bf16.msra.mxu0 %v1162
        %1181 = vmatprep.subr.bf16.mxu0 0
        %1182 = vmatpush1.bf16.msra.mxu0 %v1163
        %1183 = vmatprep.subr.bf16.mxu0 0
        %1184 = vmatpush1.bf16.msra.mxu0 %v1164
        %1185 = vmatprep.subr.bf16.mxu0 0
        %1186 = vmatpush1.bf16.msra.mxu0 %v1165
        %1187 = vmatprep.subr.bf16.mxu0 0
        %1188 = vmatpush1.bf16.msra.mxu0 %v1166
        %1189 = vmatprep.subr.bf16.mxu0 0
        %1190 = vmatpush1.bf16.msra.mxu0 %v1167
        %1191 = vmatprep.subr.bf16.mxu0 0
        %1192 = vmatpush1.bf16.msra.mxu0 %v1168
        %1193 = vmatprep.subr.bf16.mxu0 0
        %1194 = vmatpush1.bf16.msra.mxu0 0
        %1195 = vmatprep.subr.bf16.mxu0 0
        %1196 = vmatpush1.bf16.msra.mxu0 0
        %1197 = vmatprep.subr.bf16.mxu0 0
        %1198 = vmatpush1.bf16.msra.mxu0 0
        %1199 = vmatprep.subr.bf16.mxu0 0
        %1200 = vmatpush1.bf16.msra.mxu0 0
        %1201 = vmatprep.subr.bf16.mxu0 0
        %1202 = vmatpush1.bf16.msra.mxu0 0
        %1203 = vmatprep.subr.bf16.mxu0 0
        %1204 = vmatpush1.bf16.msra.mxu0 0
        %1205 = vmatprep.subr.bf16.mxu0 0
        %1206 = vmatpush1.bf16.msra.mxu0 0
        %1207 = vmatprep.subr.bf16.mxu0 0
        %1208 = vmatpush1.bf16.msra.mxu0 0
        %1209 = vmatprep.mubr.bf16.mxu0 0
        %1210 = vmatmul.mubr.bf16.gmra.mrb[0].mxu0 %v1098
        %v1211 = vpop.f32.mrb[0].mxu0
        %v1212 = vadd.f32 %v1127, %v1211
        %v1213 = vpop.f32.mrb[0].mxu0
        %v1214 = vpop.f32.mrb[0].mxu0
        %v1215 = vadd.f32 %v1127, %v1214
        %v1216 = vpop.f32.mrb[0].mxu0
        %1217 = vmatprep.mubr.bf16.mxu0 0
        %1218 = vmatmul.mubr.bf16.gmra.mrb[0].mxu0 %v1099
        %v1219 = vpop.f32.mrb[0].mxu0
        %v1220 = vadd.f32 %v1127, %v1219
        %v1221 = vpop.f32.mrb[0].mxu0
        %v1222 = vpop.f32.mrb[0].mxu0
        %v1223 = vadd.f32 %v1127, %v1222
        %v1224 = vpop.f32.mrb[0].mxu0
        %1225 = vmatprep.mubr.bf16.mxu0 0
        %1226 = vmatmul.mubr.bf16.gmra.mrb[0].mxu0 %v1100
        %v1227 = vpop.f32.mrb[0].mxu0
        %v1228 = vadd.f32 %v1127, %v1227
        %v1229 = vpop.f32.mrb[0].mxu0
        %v1230 = vpop.f32.mrb[0].mxu0
        %v1231 = vadd.f32 %v1127, %v1230
        %v1232 = vpop.f32.mrb[0].mxu0
        %1233 = vmatprep.mubr.bf16.mxu0 0
        %1234 = vmatmul.mubr.bf16.gmra.mrb[0].mxu0 %v1101
        %v1235 = vpop.f32.mrb[0].mxu0
        %v1236 = vadd.f32 %v1127, %v1235
        %v1237 = vpop.f32.mrb[0].mxu0
        %v1238 = vpop.f32.mrb[0].mxu0
        %v1239 = vadd.f32 %v1127, %v1238
        %v1240 = vpop.f32.mrb[0].mxu0
        %1241 = vmatprep.mubr.bf16.mxu0 0
        %1242 = vmatmul.mubr.bf16.gmra.mrb[0].mxu0 %v1102
        %v1243 = vpop.f32.mrb[0].mxu0
        %v1244 = vadd.f32 %v1127, %v1243
        %v1245 = vpop.f32.mrb[0].mxu0
        %v1246 = vpop.f32.mrb[0].mxu0
        %v1247 = vadd.f32 %v1127, %v1246
        %v1248 = vpop.f32.mrb[0].mxu0
        %1249 = vmatprep.mubr.bf16.mxu0 0
        %1250 = vmatmul.mubr.bf16.gmra.mrb[0].mxu0 %v1103
        %v1251 = vpop.f32.mrb[0].mxu0
        %v1252 = vadd.f32 %v1127, %v1251
        %v1253 = vpop.f32.mrb[0].mxu0
        %v1254 = vpop.f32.mrb[0].mxu0
        %v1255 = vadd.f32 %v1127, %v1254
        %v1256 = vpop.f32.mrb[0].mxu0
        %1257 = vmatprep.mubr.bf16.mxu0 0
        %1258 = vmatmul.mubr.bf16.gmra.mrb[0].mxu0 %v1104
        %v1259 = vpop.f32.mrb[0].mxu0
        %v1260 = vadd.f32 %v1127, %v1259
        %v1261 = vpop.f32.mrb[0].mxu0
        %v1262 = vpop.f32.mrb[0].mxu0
        %v1263 = vadd.f32 %v1127, %v1262
        %v1264 = vpop.f32.mrb[0].mxu0
        %1265 = vmatprep.mubr.bf16.mxu0 0
        %1266 = vmatmul.mubr.bf16.gmra.mrb[0].mxu0 %v1105
        %v1267 = vpop.f32.mrb[0].mxu0
        %v1268 = vadd.f32 %v1127, %v1267
        %v1269 = vpop.f32.mrb[0].mxu0
        %v1270 = vpop.f32.mrb[0].mxu0
        %v1271 = vadd.f32 %v1127, %v1270
        %v1272 = vpop.f32.mrb[0].mxu0
        %1273 = vdwg.mxu0
        %v1274 = vmul.f32 %v1212, %v1212
        %v1275 = vmul.f32 %v1215, %v1215
        %v1276 = vmul.f32 %v1220, %v1220
        %v1277 = vmul.f32 %v1223, %v1223
        %v1278 = vmul.f32 %v1228, %v1228
        %v1279 = vmul.f32 %v1231, %v1231
        %v1280 = vmul.f32 %v1236, %v1236
        %v1281 = vmul.f32 %v1239, %v1239
        %v1282 = vmul.f32 %v1244, %v1244
        %v1283 = vmul.f32 %v1247, %v1247
        %v1284 = vmul.f32 %v1252, %v1252
        %v1285 = vmul.f32 %v1255, %v1255
        %v1286 = vmul.f32 %v1260, %v1260
        %v1287 = vmul.f32 %v1263, %v1263
        %v1288 = vmul.f32 %v1268, %v1268
        %v1289 = vmul.f32 %v1271, %v1271
        %1290 = vadd.xlane.f32.xlu0 %v1274
        %v1291 = vpop.xlane.xlu0 %1290
        %1292 = vadd.xlane.f32.xlu0 %v1275
        %v1293 = vpop.xlane.xlu0 %1292
        %1294 = vadd.xlane.f32.xlu0 %v1276
        %v1295 = vpop.xlane.xlu0 %1294
        %1296 = vadd.xlane.f32.xlu0 %v1277
        %v1297 = vpop.xlane.xlu0 %1296
        %1298 = vadd.xlane.f32.xlu0 %v1278
        %v1299 = vpop.xlane.xlu0 %1298
        %1300 = vadd.xlane.f32.xlu0 %v1279
        %v1301 = vpop.xlane.xlu0 %1300
        %1302 = vadd.xlane.f32.xlu0 %v1280
        %v1303 = vpop.xlane.xlu0 %1302
        %1304 = vadd.xlane.f32.xlu0 %v1281
        %v1305 = vpop.xlane.xlu0 %1304
        %1306 = vadd.xlane.f32.xlu0 %v1282
        %v1307 = vpop.xlane.xlu0 %1306
        %1308 = vadd.xlane.f32.xlu0 %v1283
        %v1309 = vpop.xlane.xlu0 %1308
        %1310 = vadd.xlane.f32.xlu0 %v1284
        %v1311 = vpop.xlane.xlu0 %1310
        %1312 = vadd.xlane.f32.xlu0 %v1285
        %v1313 = vpop.xlane.xlu0 %1312
        %1314 = vadd.xlane.f32.xlu0 %v1286
        %v1315 = vpop.xlane.xlu0 %1314
        %1316 = vadd.xlane.f32.xlu0 %v1287
        %v1317 = vpop.xlane.xlu0 %1316
        %1318 = vadd.xlane.f32.xlu0 %v1288
        %v1319 = vpop.xlane.xlu0 %1318
        %1320 = vadd.xlane.f32.xlu0 %v1289
        %v1321 = vpop.xlane.xlu0 %1320
        %v1322 = vmax.f32 %v1291, 1e-24
        %v1323 = vmax.f32 %v1293, 1e-24
        %v1324 = vmax.f32 %v1295, 1e-24
        %v1325 = vmax.f32 %v1297, 1e-24
        %v1326 = vmax.f32 %v1299, 1e-24
        %v1327 = vmax.f32 %v1301, 1e-24
        %v1328 = vmax.f32 %v1303, 1e-24
        %v1329 = vmax.f32 %v1305, 1e-24
        %v1330 = vmax.f32 %v1307, 1e-24
        %v1331 = vmax.f32 %v1309, 1e-24
        %v1332 = vmax.f32 %v1311, 1e-24
        %v1333 = vmax.f32 %v1313, 1e-24
        %v1334 = vmax.f32 %v1315, 1e-24
        %v1335 = vmax.f32 %v1317, 1e-24
        %v1336 = vmax.f32 %v1319, 1e-24
        %v1337 = vmax.f32 %v1321, 1e-24
        %v1338 = vrsqrt.pop %v1322
        %v1339 = vrsqrt.pop %v1323
        %v1340 = vrsqrt.pop %v1324
        %v1341 = vrsqrt.pop %v1325
        %v1342 = vrsqrt.pop %v1326
        %v1343 = vrsqrt.pop %v1327
        %v1344 = vrsqrt.pop %v1328
        %v1345 = vrsqrt.pop %v1329
        %v1346 = vrsqrt.pop %v1330
        %v1347 = vrsqrt.pop %v1331
        %v1348 = vrsqrt.pop %v1332
        %v1349 = vrsqrt.pop %v1333
        %v1350 = vrsqrt.pop %v1334
        %v1351 = vrsqrt.pop %v1335
        %v1352 = vrsqrt.pop %v1336
        %v1353 = vrsqrt.pop %v1337
        %v1354 = vmul.f32 %v1212, %v1338
        %v1355 = vmul.f32 %v1215, %v1339
        %v1356 = vmul.f32 %v1220, %v1340
        %v1357 = vmul.f32 %v1223, %v1341
        %v1358 = vmul.f32 %v1228, %v1342
        %v1359 = vmul.f32 %v1231, %v1343
        %v1360 = vmul.f32 %v1236, %v1344
        %v1361 = vmul.f32 %v1239, %v1345
        %v1362 = vmul.f32 %v1244, %v1346
        %v1363 = vmul.f32 %v1247, %v1347
        %v1364 = vmul.f32 %v1252, %v1348
        %v1365 = vmul.f32 %v1255, %v1349
        %v1366 = vmul.f32 %v1260, %v1350
        %v1367 = vmul.f32 %v1263, %v1351
        %v1368 = vmul.f32 %v1268, %v1352
        %v1369 = vmul.f32 %v1271, %v1353
        %1370 = vst [vmem:[%s245] sm:$0xff] %v1354
        %1371 = vst [vmem:[%s245 + $0x8] sm:$0xff] %v1355
        %1372 = vst [vmem:[%s245 + $0x10] sm:$0xff] %v1356
        %1373 = vst [vmem:[%s245 + $0x18] sm:$0xff] %v1357
        %1374 = vst [vmem:[%s245 + $0x20] sm:$0xff] %v1358
        %1375 = vst [vmem:[%s245 + $0x28] sm:$0xff] %v1359
        %1376 = vst [vmem:[%s245 + $0x30] sm:$0xff] %v1360
        %1377 = vst [vmem:[%s245 + $0x38] sm:$0xff] %v1361
        %1378 = vst [vmem:[%s245 + $0x40] sm:$0xff] %v1362
        %1379 = vst [vmem:[%s245 + $0x48] sm:$0xff] %v1363
        %1380 = vst [vmem:[%s245 + $0x50] sm:$0xff] %v1364
        %1381 = vst [vmem:[%s245 + $0x58] sm:$0xff] %v1365
        %1382 = vst [vmem:[%s245 + $0x60] sm:$0xff] %v1366
        %1383 = vst [vmem:[%s245 + $0x68] sm:$0xff] %v1367
        %1384 = vst [vmem:[%s245 + $0x70] sm:$0xff] %v1368
        %1385 = vst [vmem:[%s245 + $0x78] sm:$0xff] %v1369
        %s1386 = sand.u32 %s119, 1
        %s1387 = scalar_lea.sflag [#allocation4], %s1386
        %s1388 = sand.u32 %s119, 1
        %s1389 = smul.addr %s1388, 128
        %s1390 = scalar_lea.vmem [#allocation8], %s1389
        // Predicated region
        $region49: #{tpu_custom_call.1} parent=35 // pred_check
          %p1391 = pneg %p129
        $region50: #{tpu_custom_call.1} parent=35 // pred_check_branch
          %1393 = sbr.rel (%p1391) target = $region52
        $region51: #{tpu_custom_call.1} parent=35 // pred_region
          %s1394 = smul.u32 16, %s22
          %s1396 = ssub.s32 2048, 2048
          %1397 = vsyncadd %s1387, %s1396
          %s1398 = smul.addr %s1394, 128
          %s1399 = scalar_lea.hbm %s4, %s1398
          %s1400 = sshll.u32 %s1390, 4
          %s1401 = int_to_ptr.vmem [resolvable:$true] %s1400
          %1406 = dma.vmem_to_hbm [thread:$0]  %s1401, 2048, %s1399, %s1387, 128, 128, 8
        $region52: #{tpu_custom_call.1} parent=35 // pred_fallthru
          _
      $region36: #{tpu_custom_call.1} parent=5 // pred_fallthru
        _
      %p1407 = scmp.le.s32.totalorder 2, %s17
      // Predicated region
      $region53: #{tpu_custom_call.1} parent=5 // pred_check
        %p1408 = pneg %p1407
      $region54: #{tpu_custom_call.1} parent=5 // pred_check_branch
        %1410 = sbr.rel (%p1408) target = $region56
      $region55: #{tpu_custom_call.1} parent=5 // pred_region
        %s1411 = ssub.s32 %s17, 2
        // Predicated region
        $region57: #{tpu_custom_call.1} parent=55 // pred_check
          %p1412 = pneg %p135
        $region58: #{tpu_custom_call.1} parent=55 // pred_check_branch
          %1414 = sbr.rel (%p1412) target = $region60
        $region59: #{tpu_custom_call.1} parent=55 // pred_region
          %s1415 = sand.u32 %s120, 1
          %s1416 = scalar_lea.sflag [#allocation4], %s1415
          %s1417 = sand.u32 %s120, 1
          %s1418 = smul.addr %s1417, 128
          %s1419 = scalar_lea.vmem [#allocation8], %s1418
          %1420 = dma.done %s1416, 2048
        $region60: #{tpu_custom_call.1} parent=55 // pred_fallthru
          _
      $region56: #{tpu_custom_call.1} parent=5 // pred_fallthru
        _
    $region6: #{tpu_custom_call.1} parent=1 // loop_footer
      %s21 = sadd.s32 1, %s17
    $region7: #{tpu_custom_call.1} parent=1 // loop_footer_branch
      %16 = sbr.rel target = $region3
    $region8: #{tpu_custom_call.1} parent=1 // loop_exit
      _
    %1421 = vsyncpa [#allocation3], 1
    %s1422 = scalar_lea.sflag [#allocation3], 1
    %1423 = vsyncpa %s1422, 1
    %1424 = vsyncpa [#allocation6], 1
    %1425 = vsyncpa [#allocation4], 1
    %s1426 = scalar_lea.sflag [#allocation4], 1
    %1427 = vsyncpa %s1426, 1

</llo_original>
